<compile_context>
chip_gen: v6e
topology: v6e:2x2x1
jax: 0.10.0
libtpu: 0.0.40
codegen_flags: <defaults>
</compile_context>

<pallas_src>
import math

import jax
import jax.numpy as jnp
from jax import lax
from jax.experimental import pallas as pl
from jax.experimental.pallas import tpu as pltpu

# ---------------- model hyper-parameters (small, synthetic) ----------------
B = 2            # batch
S = 8            # seq_len
D = 32           # d_model
H = 4            # nhead
HD = D // H      # head_dim
F = 64           # dim_feedforward
N = B * S
EPS = 1e-5
NEG = -1e30      # finite "minus infinity" for the additive attention mask
LANES = 128      # lane-dense parameter slab width

# Flip to jnp.bfloat16 on v6e/v7x to cut MXU passes ~3x (f32 matmuls are
# decomposed into multiple bf16 passes).  Kept f32 by default so the result
# matches the f32 reference to ~1e-6; with bf16 re-validate at ~2e-2 tolerance.
MATMUL_DTYPE = jnp.float32

# Row layout of the packed parameter slab (all blocks start at lane 0).
ROW_WQKV = 0                    # (D, 3D)   fused [Q|K|V] weight, scale folded into Q
ROW_WO   = ROW_WQKV + D         # (D, D)    out-projection weight
ROW_W1   = ROW_WO + D           # (D, F)    linear1 weight
ROW_W2   = ROW_W1 + D           # (F, D)    linear2 weight
ROW_VEC  = ROW_W2 + F           # 8 vector rows:
#   +0 bqkv (3D)   +1 o_b (D)   +2 l1_b (F)   +3 l2_b (D)
#   +4 n1_w (D)    +5 n1_b (D)  +6 n2_w (D)   +7 n2_b (D)
PROWS = ROW_VEC + 8             # 168 rows (multiple of 8)


def _layer_norm(x, w, b):
    mu = jnp.mean(x, axis=-1, keepdims=True)
    var = jnp.mean((x - mu) ** 2, axis=-1, keepdims=True)
    return (x - mu) * lax.rsqrt(var + EPS) * w + b


# ------------------------------- the kernel ---------------------------------
def encoder_layer_kernel(x_ref, mask_ref, p_ref, out_ref):
    x = x_ref[...]                                  # (S, D) f32 — this batch block
    bias = mask_ref[...]                            # (S, S) additive 0 / -1e30

    xm = x.astype(MATMUL_DTYPE)

    # ---- fused QKV projection: ONE wide matmul (S,D)@(D,3D) ----------------
    w_qkv = p_ref[ROW_WQKV:ROW_WQKV + D, 0:3 * D].astype(MATMUL_DTYPE)   # (D, 3D)
    b_qkv = p_ref[ROW_VEC + 0:ROW_VEC + 1, 0:3 * D]                      # (1, 3D)
    qkv = jnp.dot(xm, w_qkv, preferred_element_type=jnp.float32) + b_qkv  # (S, 3D)

    q = qkv[:, 0:D]                                 # (S, D)  scale pre-folded
    k = qkv[:, D:2 * D]                             # (S, D)
    v = qkv[:, 2 * D:3 * D].astype(MATMUL_DTYPE)    # (S, D)

    # ---- single K transpose; per-head slices are sublane-aligned -----------
    kT = jnp.transpose(k).astype(MATMUL_DTYPE)      # (D, S)
    qm = q.astype(MATMUL_DTYPE)

    # ---- attention core: H tiny matmuls, exact softmax ---------------------
    o_parts = []
    for h in range(H):
        sl = slice(h * HD, (h + 1) * HD)
        s = jnp.dot(qm[:, sl], kT[sl, :],
                    preferred_element_type=jnp.float32) + bias           # (S, S)
        s = s - jnp.max(s, axis=-1, keepdims=True)
        p = jnp.exp(s)
        p = p / jnp.sum(p, axis=-1, keepdims=True)   # exact divide (see review)
        o_parts.append(jnp.dot(p.astype(MATMUL_DTYPE), v[:, sl],
                               preferred_element_type=jnp.float32))      # (S, HD)
    o = jnp.concatenate(o_parts, axis=-1)            # (S, D) head-major concat

    # ---- head merge + out projection: ONE (S,D)@(D,D) matmul ---------------
    w_o = p_ref[ROW_WO:ROW_WO + D, 0:D].astype(MATMUL_DTYPE)
    attn = jnp.dot(o.astype(MATMUL_DTYPE), w_o, preferred_element_type=jnp.float32)
    attn = attn + p_ref[ROW_VEC + 1:ROW_VEC + 2, 0:D]                    # out_proj bias

    # ---- residual + layernorm 1 ---------------------------------------------
    x1 = _layer_norm(x + attn,
                     p_ref[ROW_VEC + 4:ROW_VEC + 5, 0:D],
                     p_ref[ROW_VEC + 5:ROW_VEC + 6, 0:D])

    # ---- feed-forward --------------------------------------------------------
    w1 = p_ref[ROW_W1:ROW_W1 + D, 0:F].astype(MATMUL_DTYPE)
    h1 = jnp.dot(x1.astype(MATMUL_DTYPE), w1, preferred_element_type=jnp.float32)
    h1 = jnp.maximum(h1 + p_ref[ROW_VEC + 2:ROW_VEC + 3, 0:F], 0.0)      # ReLU

    w2 = p_ref[ROW_W2:ROW_W2 + F, 0:D].astype(MATMUL_DTYPE)
    h2 = jnp.dot(h1.astype(MATMUL_DTYPE), w2, preferred_element_type=jnp.float32)
    h2 = h2 + p_ref[ROW_VEC + 3:ROW_VEC + 4, 0:D]                        # linear2 bias

    # ---- residual + layernorm 2 ----------------------------------------------
    out_ref[...] = _layer_norm(x1 + h2,
                               p_ref[ROW_VEC + 6:ROW_VEC + 7, 0:D],
                               p_ref[ROW_VEC + 7:ROW_VEC + 8, 0:D]).astype(out_ref.dtype)


# ------------------------------- the wrapper --------------------------------
def masked_transformer_encoder_layer(src, mask, slab):
    """src: (B,S,D) f32; mask: (S,S) (0 = masked); slab: packed (PROWS,128) params."""
    x2d = src.reshape(N, D)
    mask_add = jnp.where(mask == 0, jnp.float32(NEG), jnp.float32(0.0))   # (S, S)

    out2d = pl.pallas_call(
        encoder_layer_kernel,
        out_shape=jax.ShapeDtypeStruct((N, D), jnp.float32),
        grid_spec=pltpu.PrefetchScalarGridSpec(
            num_scalar_prefetch=0,
            grid=(B,),                                        # one step per batch block
            in_specs=[
                pl.BlockSpec((S, D), lambda b: (b, 0)),       # activations (per batch)
                pl.BlockSpec((S, S), lambda b: (0, 0)),       # additive mask (shared)
                pl.BlockSpec((PROWS, LANES), lambda b: (0, 0)),  # packed params (shared)
            ],
            out_specs=pl.BlockSpec((S, D), lambda b: (b, 0)),
        ),
        compiler_params=pltpu.CompilerParams(
            dimension_semantics=("parallel",)),               # 2nd TC on v7x
    )(x2d, mask_add, slab)
    return out2d.reshape(B, S, D)


# ------------------- parameter init (PyTorch layout) + packing ---------------
def init_params(key):
    ks = jax.random.split(key, 12)

    def lin_w(k, out_f, in_f):
        bound = 1.0 / math.sqrt(in_f)
        return jax.random.uniform(k, (out_f, in_f), jnp.float32, -bound, bound)

    def lin_b(k, out_f, in_f):
        bound = 1.0 / math.sqrt(in_f)
        return jax.random.uniform(k, (out_f,), jnp.float32, -bound, bound)

    return {
        "q_w": lin_w(ks[0], D, D), "q_b": lin_b(ks[1], D, D),
        "k_w": lin_w(ks[2], D, D), "k_b": lin_b(ks[3], D, D),
        "v_w": lin_w(ks[4], D, D), "v_b": lin_b(ks[5], D, D),
        "o_w": lin_w(ks[6], D, D), "o_b": lin_b(ks[7], D, D),
        "l1_w": lin_w(ks[8], F, D), "l1_b": lin_b(ks[9], F, D),
        "l2_w": lin_w(ks[10], D, F), "l2_b": lin_b(ks[11], D, F),
        "n1_w": jnp.ones((D,), jnp.float32), "n1_b": jnp.zeros((D,), jnp.float32),
        "n2_w": jnp.ones((D,), jnp.float32), "n2_b": jnp.zeros((D,), jnp.float32),
    }


def pack_params(p):
    """One-time transform into a single lane-dense (PROWS, 128) f32 slab."""
    scale = 1.0 / math.sqrt(HD)
    wq = p["q_w"].T * scale                        # fold 1/sqrt(head_dim) into Q
    bq = p["q_b"] * scale
    w_qkv = jnp.concatenate([wq, p["k_w"].T, p["v_w"].T], axis=1)        # (D, 3D)
    b_qkv = jnp.concatenate([bq, p["k_b"], p["v_b"]])                    # (3D,)

    def row_block(a):
        a = jnp.atleast_2d(a)
        return jnp.pad(a, ((0, 0), (0, LANES - a.shape[1])))

    slab = jnp.concatenate([
        row_block(w_qkv),              # rows ROW_WQKV : +D
        row_block(p["o_w"].T),         # rows ROW_WO   : +D
        row_block(p["l1_w"].T),        # rows ROW_W1   : +D
        row_block(p["l2_w"].T),        # rows ROW_W2   : +F
        row_block(b_qkv),              # ROW_VEC+0
        row_block(p["o_b"]),           # +1
        row_block(p["l1_b"]),          # +2
        row_block(p["l2_b"]),          # +3
        row_block(p["n1_w"]),          # +4
        row_block(p["n1_b"]),          # +5
        row_block(p["n2_w"]),          # +6
        row_block(p["n2_b"]),          # +7
    ], axis=0)
    assert slab.shape == (PROWS, LANES)
    return slab


# ---------------------------- pure-JAX reference ----------------------------
def reference_forward(src, mask, p):
    def ln(x, w, b):
        mu = jnp.mean(x, axis=-1, keepdims=True)
        var = jnp.mean((x - mu) ** 2, axis=-1, keepdims=True)
        return (x - mu) / jnp.sqrt(var + EPS) * w + b

    def linear(x, w, b):
        return x @ w.T + b

    q = linear(src, p["q_w"], p["q_b"]).reshape(B, S, H, HD).transpose(0, 2, 1, 3)
    k = linear(src, p["k_w"], p["k_b"]).reshape(B, S, H, HD).transpose(0, 2, 1, 3)
    v = linear(src, p["v_w"], p["v_b"]).reshape(B, S, H, HD).transpose(0, 2, 1, 3)
    s = jnp.einsum("bhqd,bhkd->bhqk", q, k) / math.sqrt(HD)
    s = jnp.where(mask[None, None] == 0, -jnp.inf, s)
    w = jax.nn.softmax(s, axis=-1)
    attn = jnp.einsum("bhqk,bhkd->bhqd", w, v)
    attn = attn.transpose(0, 2, 1, 3).reshape(B, S, D)
    attn = linear(attn, p["o_w"], p["o_b"])
    x1 = ln(src + attn, p["n1_w"], p["n1_b"])
    h = jax.nn.relu(linear(x1, p["l1_w"], p["l1_b"]))
    return ln(x1 + linear(h, p["l2_w"], p["l2_b"]), p["n2_w"], p["n2_b"])


if __name__ == "__main__":
    key = jax.random.PRNGKey(0)
    k_src, k_p = jax.random.split(key)
    src = jax.random.normal(k_src, (B, S, D), jnp.float32)
    # lower-triangular (causal-style) mask: 0 = masked; every row keeps >= 1 key
    mask = jnp.tril(jnp.ones((S, S), jnp.float32))

    params = init_params(k_p)        # canonical (PyTorch-layout) parameters
    slab = pack_params(params)       # one-time transform into the kernel slab

    out = masked_transformer_encoder_layer(src, mask, slab)
    out = jax.block_until_ready(out)

    ref = reference_forward(src, mask, params)
    assert out.shape == (B, S, D)
    err = float(jnp.max(jnp.abs(out - ref)))
    # exact softmax divide + f32 matmuls -> tight tolerance (was 5e-3 with approx recip)
    assert jnp.allclose(out, ref, atol=1e-3, rtol=1e-3), err
    print("KERNEL_OK")
</pallas_src>

<mosaic_0001>
module attributes {stable_mosaic.version = 11 : i64} {
  func.func @encoder_layer_kernel(%arg0: i32, %arg1: memref<8x32xf32, #tpu.memory_space<vmem>>, %arg2: memref<8x8xf32, #tpu.memory_space<vmem>>, %arg3: memref<168x128xf32, #tpu.memory_space<vmem>>, %arg4: memref<8x32xf32, #tpu.memory_space<vmem>>) attributes {dimension_semantics = [#tpu.dimension_semantics<parallel>], iteration_bounds = array<i64: 2>, scalar_prefetch = 0 : i64, scratch_operands = 0 : i64, tpu.core_type = #tpu.core_type<tc>, window_params = [{transform_indices = @transform_0, window_bounds = array<i64: 8, 32>}, {pipeline_mode = #tpu.pipeline_mode<synchronous>, transform_indices = @transform_1, window_bounds = array<i64: 8, 8>}, {pipeline_mode = #tpu.pipeline_mode<synchronous>, transform_indices = @transform_2, window_bounds = array<i64: 168, 128>}, {transform_indices = @transform_3, window_bounds = array<i64: 8, 32>}]} {
    %c0 = arith.constant 0 : index
    %c0_0 = arith.constant 0 : index
    %0 = vector.load %arg1[%c0, %c0_0] : memref<8x32xf32, #tpu.memory_space<vmem>>, vector<8x32xf32>
    %c0_1 = arith.constant 0 : index
    %c0_2 = arith.constant 0 : index
    %1 = vector.load %arg2[%c0_1, %c0_2] : memref<8x8xf32, #tpu.memory_space<vmem>>, vector<8x8xf32>
    %c0_3 = arith.constant 0 : index
    %c0_4 = arith.constant 0 : index
    %2 = vector.load %arg3[%c0_3, %c0_4] : memref<168x128xf32, #tpu.memory_space<vmem>>, vector<32x96xf32>
    %c160 = arith.constant 160 : index
    %c0_5 = arith.constant 0 : index
    %3 = vector.load %arg3[%c160, %c0_5] : memref<168x128xf32, #tpu.memory_space<vmem>>, vector<1x96xf32>
    %cst = arith.constant dense<0.000000e+00> : vector<8x96xf32>
    %4 = tpu.matmul %0, %2, %cst {dimension_numbers = #tpu.dot_dimension_numbers<[1], [0], [0], [1], [0, 0, 1, 1], [], []>} : vector<8x32xf32>, vector<32x96xf32>, vector<8x96xf32> -> vector<8x96xf32>
    %5 = vector.broadcast %3 : vector<1x96xf32> to vector<8x96xf32>
    %6 = arith.addf %4, %5 : vector<8x96xf32>
    %7 = vector.extract_strided_slice %6 {offsets = [0, 0], sizes = [8, 32], strides = [1, 1]} : vector<8x96xf32> to vector<8x32xf32>
    %8 = vector.extract_strided_slice %6 {offsets = [0, 32], sizes = [8, 32], strides = [1, 1]} : vector<8x96xf32> to vector<8x32xf32>
    %9 = vector.extract_strided_slice %6 {offsets = [0, 64], sizes = [8, 32], strides = [1, 1]} : vector<8x96xf32> to vector<8x32xf32>
    %10 = tpu.transpose %8, [1, 0] : vector<8x32xf32> -> vector<32x8xf32>
    %11 = vector.extract_strided_slice %7 {offsets = [0, 0], sizes = [8, 8], strides = [1, 1]} : vector<8x32xf32> to vector<8x8xf32>
    %12 = vector.extract_strided_slice %10 {offsets = [0, 0], sizes = [8, 8], strides = [1, 1]} : vector<32x8xf32> to vector<8x8xf32>
    %cst_6 = arith.constant dense<0.000000e+00> : vector<8x8xf32>
    %13 = tpu.matmul %11, %12, %cst_6 {dimension_numbers = #tpu.dot_dimension_numbers<[1], [0], [0], [1], [0, 0, 1, 1], [], []>} : vector<8x8xf32>, vector<8x8xf32>, vector<8x8xf32> -> vector<8x8xf32>
    %14 = arith.addf %13, %1 : vector<8x8xf32>
    %cst_7 = arith.constant dense<0xFF800000> : vector<8xf32>
    %15 = vector.multi_reduction <maximumf>, %14, %cst_7 [1] : vector<8x8xf32> to vector<8xf32>
    %16 = vector.shape_cast %15 : vector<8xf32> to vector<8x1xf32>
    %17 = vector.broadcast %16 : vector<8x1xf32> to vector<8x8xf32>
    %18 = arith.subf %14, %17 : vector<8x8xf32>
    %19 = math.exp %18 : vector<8x8xf32>
    %cst_8 = arith.constant dense<0.000000e+00> : vector<8xf32>
    %20 = vector.multi_reduction <add>, %19, %cst_8 [1] : vector<8x8xf32> to vector<8xf32>
    %21 = vector.shape_cast %20 : vector<8xf32> to vector<8x1xf32>
    %22 = vector.broadcast %21 : vector<8x1xf32> to vector<8x8xf32>
    %23 = arith.divf %19, %22 : vector<8x8xf32>
    %24 = vector.extract_strided_slice %9 {offsets = [0, 0], sizes = [8, 8], strides = [1, 1]} : vector<8x32xf32> to vector<8x8xf32>
    %cst_9 = arith.constant dense<0.000000e+00> : vector<8x8xf32>
    %25 = tpu.matmul %23, %24, %cst_9 {dimension_numbers = #tpu.dot_dimension_numbers<[1], [0], [0], [1], [0, 0, 1, 1], [], []>} : vector<8x8xf32>, vector<8x8xf32>, vector<8x8xf32> -> vector<8x8xf32>
    %26 = vector.extract_strided_slice %7 {offsets = [0, 8], sizes = [8, 8], strides = [1, 1]} : vector<8x32xf32> to vector<8x8xf32>
    %27 = vector.extract_strided_slice %10 {offsets = [8, 0], sizes = [8, 8], strides = [1, 1]} : vector<32x8xf32> to vector<8x8xf32>
    %cst_10 = arith.constant dense<0.000000e+00> : vector<8x8xf32>
    %28 = tpu.matmul %26, %27, %cst_10 {dimension_numbers = #tpu.dot_dimension_numbers<[1], [0], [0], [1], [0, 0, 1, 1], [], []>} : vector<8x8xf32>, vector<8x8xf32>, vector<8x8xf32> -> vector<8x8xf32>
    %29 = arith.addf %28, %1 : vector<8x8xf32>
    %cst_11 = arith.constant dense<0xFF800000> : vector<8xf32>
    %30 = vector.multi_reduction <maximumf>, %29, %cst_11 [1] : vector<8x8xf32> to vector<8xf32>
    %31 = vector.shape_cast %30 : vector<8xf32> to vector<8x1xf32>
    %32 = vector.broadcast %31 : vector<8x1xf32> to vector<8x8xf32>
    %33 = arith.subf %29, %32 : vector<8x8xf32>
    %34 = math.exp %33 : vector<8x8xf32>
    %cst_12 = arith.constant dense<0.000000e+00> : vector<8xf32>
    %35 = vector.multi_reduction <add>, %34, %cst_12 [1] : vector<8x8xf32> to vector<8xf32>
    %36 = vector.shape_cast %35 : vector<8xf32> to vector<8x1xf32>
    %37 = vector.broadcast %36 : vector<8x1xf32> to vector<8x8xf32>
    %38 = arith.divf %34, %37 : vector<8x8xf32>
    %39 = vector.extract_strided_slice %9 {offsets = [0, 8], sizes = [8, 8], strides = [1, 1]} : vector<8x32xf32> to vector<8x8xf32>
    %cst_13 = arith.constant dense<0.000000e+00> : vector<8x8xf32>
    %40 = tpu.matmul %38, %39, %cst_13 {dimension_numbers = #tpu.dot_dimension_numbers<[1], [0], [0], [1], [0, 0, 1, 1], [], []>} : vector<8x8xf32>, vector<8x8xf32>, vector<8x8xf32> -> vector<8x8xf32>
    %41 = vector.extract_strided_slice %7 {offsets = [0, 16], sizes = [8, 8], strides = [1, 1]} : vector<8x32xf32> to vector<8x8xf32>
    %42 = vector.extract_strided_slice %10 {offsets = [16, 0], sizes = [8, 8], strides = [1, 1]} : vector<32x8xf32> to vector<8x8xf32>
    %cst_14 = arith.constant dense<0.000000e+00> : vector<8x8xf32>
    %43 = tpu.matmul %41, %42, %cst_14 {dimension_numbers = #tpu.dot_dimension_numbers<[1], [0], [0], [1], [0, 0, 1, 1], [], []>} : vector<8x8xf32>, vector<8x8xf32>, vector<8x8xf32> -> vector<8x8xf32>
    %44 = arith.addf %43, %1 : vector<8x8xf32>
    %cst_15 = arith.constant dense<0xFF800000> : vector<8xf32>
    %45 = vector.multi_reduction <maximumf>, %44, %cst_15 [1] : vector<8x8xf32> to vector<8xf32>
    %46 = vector.shape_cast %45 : vector<8xf32> to vector<8x1xf32>
    %47 = vector.broadcast %46 : vector<8x1xf32> to vector<8x8xf32>
    %48 = arith.subf %44, %47 : vector<8x8xf32>
    %49 = math.exp %48 : vector<8x8xf32>
    %cst_16 = arith.constant dense<0.000000e+00> : vector<8xf32>
    %50 = vector.multi_reduction <add>, %49, %cst_16 [1] : vector<8x8xf32> to vector<8xf32>
    %51 = vector.shape_cast %50 : vector<8xf32> to vector<8x1xf32>
    %52 = vector.broadcast %51 : vector<8x1xf32> to vector<8x8xf32>
    %53 = arith.divf %49, %52 : vector<8x8xf32>
    %54 = vector.extract_strided_slice %9 {offsets = [0, 16], sizes = [8, 8], strides = [1, 1]} : vector<8x32xf32> to vector<8x8xf32>
    %cst_17 = arith.constant dense<0.000000e+00> : vector<8x8xf32>
    %55 = tpu.matmul %53, %54, %cst_17 {dimension_numbers = #tpu.dot_dimension_numbers<[1], [0], [0], [1], [0, 0, 1, 1], [], []>} : vector<8x8xf32>, vector<8x8xf32>, vector<8x8xf32> -> vector<8x8xf32>
    %56 = vector.extract_strided_slice %7 {offsets = [0, 24], sizes = [8, 8], strides = [1, 1]} : vector<8x32xf32> to vector<8x8xf32>
    %57 = vector.extract_strided_slice %10 {offsets = [24, 0], sizes = [8, 8], strides = [1, 1]} : vector<32x8xf32> to vector<8x8xf32>
    %cst_18 = arith.constant dense<0.000000e+00> : vector<8x8xf32>
    %58 = tpu.matmul %56, %57, %cst_18 {dimension_numbers = #tpu.dot_dimension_numbers<[1], [0], [0], [1], [0, 0, 1, 1], [], []>} : vector<8x8xf32>, vector<8x8xf32>, vector<8x8xf32> -> vector<8x8xf32>
    %59 = arith.addf %58, %1 : vector<8x8xf32>
    %cst_19 = arith.constant dense<0xFF800000> : vector<8xf32>
    %60 = vector.multi_reduction <maximumf>, %59, %cst_19 [1] : vector<8x8xf32> to vector<8xf32>
    %61 = vector.shape_cast %60 : vector<8xf32> to vector<8x1xf32>
    %62 = vector.broadcast %61 : vector<8x1xf32> to vector<8x8xf32>
    %63 = arith.subf %59, %62 : vector<8x8xf32>
    %64 = math.exp %63 : vector<8x8xf32>
    %cst_20 = arith.constant dense<0.000000e+00> : vector<8xf32>
    %65 = vector.multi_reduction <add>, %64, %cst_20 [1] : vector<8x8xf32> to vector<8xf32>
    %66 = vector.shape_cast %65 : vector<8xf32> to vector<8x1xf32>
    %67 = vector.broadcast %66 : vector<8x1xf32> to vector<8x8xf32>
    %68 = arith.divf %64, %67 : vector<8x8xf32>
    %69 = vector.extract_strided_slice %9 {offsets = [0, 24], sizes = [8, 8], strides = [1, 1]} : vector<8x32xf32> to vector<8x8xf32>
    %cst_21 = arith.constant dense<0.000000e+00> : vector<8x8xf32>
    %70 = tpu.matmul %68, %69, %cst_21 {dimension_numbers = #tpu.dot_dimension_numbers<[1], [0], [0], [1], [0, 0, 1, 1], [], []>} : vector<8x8xf32>, vector<8x8xf32>, vector<8x8xf32> -> vector<8x8xf32>
    %71 = tpu.concatenate %25, %40, %55, %70 in 1 : vector<8x8xf32>, vector<8x8xf32>, vector<8x8xf32>, vector<8x8xf32> -> vector<8x32xf32>
    %c32 = arith.constant 32 : index
    %c0_22 = arith.constant 0 : index
    %72 = vector.load %arg3[%c32, %c0_22] : memref<168x128xf32, #tpu.memory_space<vmem>>, vector<32x32xf32>
    %cst_23 = arith.constant dense<0.000000e+00> : vector<8x32xf32>
    %73 = tpu.matmul %71, %72, %cst_23 {dimension_numbers = #tpu.dot_dimension_numbers<[1], [0], [0], [1], [0, 0, 1, 1], [], []>} : vector<8x32xf32>, vector<32x32xf32>, vector<8x32xf32> -> vector<8x32xf32>
    %c161 = arith.constant 161 : index
    %c0_24 = arith.constant 0 : index
    %74 = vector.load %arg3[%c161, %c0_24] : memref<168x128xf32, #tpu.memory_space<vmem>>, vector<1x32xf32>
    %75 = vector.broadcast %74 : vector<1x32xf32> to vector<8x32xf32>
    %76 = arith.addf %73, %75 : vector<8x32xf32>
    %77 = arith.addf %0, %76 : vector<8x32xf32>
    %c164 = arith.constant 164 : index
    %c0_25 = arith.constant 0 : index
    %78 = vector.load %arg3[%c164, %c0_25] : memref<168x128xf32, #tpu.memory_space<vmem>>, vector<1x32xf32>
    %c165 = arith.constant 165 : index
    %c0_26 = arith.constant 0 : index
    %79 = vector.load %arg3[%c165, %c0_26] : memref<168x128xf32, #tpu.memory_space<vmem>>, vector<1x32xf32>
    %cst_27 = arith.constant dense<0.000000e+00> : vector<8xf32>
    %80 = vector.multi_reduction <add>, %77, %cst_27 [1] : vector<8x32xf32> to vector<8xf32>
    %81 = vector.shape_cast %80 : vector<8xf32> to vector<8x1xf32>
    %cst_28 = arith.constant 3.200000e+01 : f32
    %82 = vector.broadcast %cst_28 : f32 to vector<8x1xf32>
    %83 = arith.divf %81, %82 : vector<8x1xf32>
    %84 = vector.broadcast %83 : vector<8x1xf32> to vector<8x32xf32>
    %85 = arith.subf %77, %84 : vector<8x32xf32>
    %86 = arith.mulf %85, %85 : vector<8x32xf32>
    %cst_29 = arith.constant dense<0.000000e+00> : vector<8xf32>
    %87 = vector.multi_reduction <add>, %86, %cst_29 [1] : vector<8x32xf32> to vector<8xf32>
    %88 = vector.shape_cast %87 : vector<8xf32> to vector<8x1xf32>
    %cst_30 = arith.constant 3.200000e+01 : f32
    %89 = vector.broadcast %cst_30 : f32 to vector<8x1xf32>
    %90 = arith.divf %88, %89 : vector<8x1xf32>
    %91 = vector.broadcast %83 : vector<8x1xf32> to vector<8x32xf32>
    %92 = arith.subf %77, %91 : vector<8x32xf32>
    %cst_31 = arith.constant 9.99999974E-6 : f32
    %93 = vector.broadcast %cst_31 : f32 to vector<8x1xf32>
    %94 = arith.addf %90, %93 : vector<8x1xf32>
    %95 = math.rsqrt %94 : vector<8x1xf32>
    %96 = vector.broadcast %95 : vector<8x1xf32> to vector<8x32xf32>
    %97 = arith.mulf %92, %96 : vector<8x32xf32>
    %98 = vector.broadcast %78 : vector<1x32xf32> to vector<8x32xf32>
    %99 = arith.mulf %97, %98 : vector<8x32xf32>
    %100 = vector.broadcast %79 : vector<1x32xf32> to vector<8x32xf32>
    %101 = arith.addf %99, %100 : vector<8x32xf32>
    %c64 = arith.constant 64 : index
    %c0_32 = arith.constant 0 : index
    %102 = vector.load %arg3[%c64, %c0_32] : memref<168x128xf32, #tpu.memory_space<vmem>>, vector<32x64xf32>
    %cst_33 = arith.constant dense<0.000000e+00> : vector<8x64xf32>
    %103 = tpu.matmul %101, %102, %cst_33 {dimension_numbers = #tpu.dot_dimension_numbers<[1], [0], [0], [1], [0, 0, 1, 1], [], []>} : vector<8x32xf32>, vector<32x64xf32>, vector<8x64xf32> -> vector<8x64xf32>
    %c162 = arith.constant 162 : index
    %c0_34 = arith.constant 0 : index
    %104 = vector.load %arg3[%c162, %c0_34] : memref<168x128xf32, #tpu.memory_space<vmem>>, vector<1x64xf32>
    %105 = vector.broadcast %104 : vector<1x64xf32> to vector<8x64xf32>
    %106 = arith.addf %103, %105 : vector<8x64xf32>
    %cst_35 = arith.constant 0.000000e+00 : f32
    %107 = vector.broadcast %cst_35 : f32 to vector<8x64xf32>
    %108 = arith.maximumf %106, %107 : vector<8x64xf32>
    %c96 = arith.constant 96 : index
    %c0_36 = arith.constant 0 : index
    %109 = vector.load %arg3[%c96, %c0_36] : memref<168x128xf32, #tpu.memory_space<vmem>>, vector<64x32xf32>
    %cst_37 = arith.constant dense<0.000000e+00> : vector<8x32xf32>
    %110 = tpu.matmul %108, %109, %cst_37 {dimension_numbers = #tpu.dot_dimension_numbers<[1], [0], [0], [1], [0, 0, 1, 1], [], []>} : vector<8x64xf32>, vector<64x32xf32>, vector<8x32xf32> -> vector<8x32xf32>
    %c163 = arith.constant 163 : index
    %c0_38 = arith.constant 0 : index
    %111 = vector.load %arg3[%c163, %c0_38] : memref<168x128xf32, #tpu.memory_space<vmem>>, vector<1x32xf32>
    %112 = vector.broadcast %111 : vector<1x32xf32> to vector<8x32xf32>
    %113 = arith.addf %110, %112 : vector<8x32xf32>
    %114 = arith.addf %101, %113 : vector<8x32xf32>
    %c166 = arith.constant 166 : index
    %c0_39 = arith.constant 0 : index
    %115 = vector.load %arg3[%c166, %c0_39] : memref<168x128xf32, #tpu.memory_space<vmem>>, vector<1x32xf32>
    %c167 = arith.constant 167 : index
    %c0_40 = arith.constant 0 : index
    %116 = vector.load %arg3[%c167, %c0_40] : memref<168x128xf32, #tpu.memory_space<vmem>>, vector<1x32xf32>
    %cst_41 = arith.constant dense<0.000000e+00> : vector<8xf32>
    %117 = vector.multi_reduction <add>, %114, %cst_41 [1] : vector<8x32xf32> to vector<8xf32>
    %118 = vector.shape_cast %117 : vector<8xf32> to vector<8x1xf32>
    %cst_42 = arith.constant 3.200000e+01 : f32
    %119 = vector.broadcast %cst_42 : f32 to vector<8x1xf32>
    %120 = arith.divf %118, %119 : vector<8x1xf32>
    %121 = vector.broadcast %120 : vector<8x1xf32> to vector<8x32xf32>
    %122 = arith.subf %114, %121 : vector<8x32xf32>
    %123 = arith.mulf %122, %122 : vector<8x32xf32>
    %cst_43 = arith.constant dense<0.000000e+00> : vector<8xf32>
    %124 = vector.multi_reduction <add>, %123, %cst_43 [1] : vector<8x32xf32> to vector<8xf32>
    %125 = vector.shape_cast %124 : vector<8xf32> to vector<8x1xf32>
    %cst_44 = arith.constant 3.200000e+01 : f32
    %126 = vector.broadcast %cst_44 : f32 to vector<8x1xf32>
    %127 = arith.divf %125, %126 : vector<8x1xf32>
    %128 = vector.broadcast %120 : vector<8x1xf32> to vector<8x32xf32>
    %129 = arith.subf %114, %128 : vector<8x32xf32>
    %cst_45 = arith.constant 9.99999974E-6 : f32
    %130 = vector.broadcast %cst_45 : f32 to vector<8x1xf32>
    %131 = arith.addf %127, %130 : vector<8x1xf32>
    %132 = math.rsqrt %131 : vector<8x1xf32>
    %133 = vector.broadcast %132 : vector<8x1xf32> to vector<8x32xf32>
    %134 = arith.mulf %129, %133 : vector<8x32xf32>
    %135 = vector.broadcast %115 : vector<1x32xf32> to vector<8x32xf32>
    %136 = arith.mulf %134, %135 : vector<8x32xf32>
    %137 = vector.broadcast %116 : vector<1x32xf32> to vector<8x32xf32>
    %138 = arith.addf %136, %137 : vector<8x32xf32>
    %c0_46 = arith.constant 0 : index
    %c0_47 = arith.constant 0 : index
    %139 = vector.load %arg4[%c0_46, %c0_47] : memref<8x32xf32, #tpu.memory_space<vmem>>, vector<8x32xf32>
    tpu.vector_store %arg4[%c0_46, %c0_47], %138 {strides = array<i32>} : memref<8x32xf32, #tpu.memory_space<vmem>>, vector<8x32xf32>,
    return
  }
  func.func @transform_0(%arg0: i32) -> (i32, i32) {
    %c0_i32 = arith.constant 0 : i32
    %c0_i32_0 = arith.constant 0 : i32
    return %arg0, %c0_i32 : i32, i32
  }
  func.func @transform_1(%arg0: i32) -> (i32, i32) {
    %c0_i32 = arith.constant 0 : i32
    %c0_i32_0 = arith.constant 0 : i32
    %c0_i32_1 = arith.constant 0 : i32
    return %c0_i32, %c0_i32_0 : i32, i32
  }
  func.func @transform_2(%arg0: i32) -> (i32, i32) {
    %c0_i32 = arith.constant 0 : i32
    %c0_i32_0 = arith.constant 0 : i32
    %c0_i32_1 = arith.constant 0 : i32
    return %c0_i32, %c0_i32_0 : i32, i32
  }
  func.func @transform_3(%arg0: i32) -> (i32, i32) {
    %c0_i32 = arith.constant 0 : i32
    %c0_i32_0 = arith.constant 0 : i32
    return %arg0, %c0_i32 : i32, i32
  }
}

</mosaic_0001>

<llo_original>
// kernel: tpu_custom_call.1
$region0: #{tpu_custom_call.1}
  #allocation0 [shape = 'u32[]', space=smem, size = 0x4, offset = 0x4, fixed_abs, tag = 'smem constant byte address 0x4 - core index']
  #allocation1 [shape = 'u32[144,128]{1,0:T(1,128)}', space=vmem, size = 0x12000, scoped, tag = 'internal scratch']
  %s0 = inlined_call_operand.hbm [shape: f32[16,32], index: 0, kind: input, shape index: {}]
  %s1 = inlined_call_operand.hbm [shape: f32[8,8], index: 1, kind: input, shape index: {}]
  %s2 = inlined_call_operand.hbm [shape: f32[168,128], index: 2, kind: input, shape index: {}]
  %s3 = inlined_call_operand.hbm [shape: f32[16,32], index: 3, kind: output, shape index: {}]
  %s4 = sld [smem:[#allocation0]]
  $region57: #{tpu_custom_call.1} parent=0
    _
  %s6 = ssub.s32 1, %s4
  %s7 = scalar_select 0, %s6, %s4
  $region1: #{tpu_custom_call.1} parent=0
    #allocation2 [shape = 'u8[8192]{0}', space=vmem, size = 0x2000, scoped, tag = 'input window, operand 0']
    #allocation3 [shape = 's32[2]{0}', space=sflag, size = 0x8, scoped, tag = 'scoped memory for tpu_custom_call.1']
    #allocation4 [shape = 's32[2]{0}', space=sflag, size = 0x8, scoped, tag = 'scoped memory for tpu_custom_call.1']
    #allocation5 [shape = 'u8[4096]{0}', space=vmem, size = 0x1000, scoped, tag = 'input window, operand 1, single buffered']
    #allocation6 [shape = 's32[1]{0}', space=sflag, size = 0x4, scoped, tag = 'scoped memory for tpu_custom_call.1']
    #allocation7 [shape = 'u8[86016]{0}', space=vmem, size = 0x15000, scoped, tag = 'input window, operand 2, single buffered']
    #allocation8 [shape = 'u8[8192]{0}', space=vmem, size = 0x2000, scoped, tag = 'output window, operand 0']
    %8 = vsyncpa [#allocation3], 0
    %s9 = scalar_lea.sflag [#allocation3], 1
    %10 = vsyncpa %s9, 0
    %11 = vsyncpa [#allocation6], 0
    %12 = vsyncpa [#allocation4], 0
    %s13 = scalar_lea.sflag [#allocation4], 1
    %14 = vsyncpa %s13, 0
    loop: start=0, step=1, limit=4
    $region2: #{tpu_custom_call.1} parent=1 // loop_pre_header
      _
    $region3: #{tpu_custom_call.1} parent=1 // loop_header
      %s16 = sphi 0, %s20
      %p17 = scmp.ge.s32.totalorder %s16, 4
      %s26 = sphi 0, %s28
      %s29 = sphi 0, %s26
      %s30 = sphi 0, %s29
      %s46 = sphi 0, %s30
      %s50 = sphi 0, %s50
      %s52 = sphi 0, %s50
      %s53 = sphi 0, %s52
      %s67 = sphi 0, %s53
      %s71 = sphi 0, %s71
      %s73 = sphi 0, %s71
      %s74 = sphi 0, %s73
      %s88 = sphi 0, %s74
      %s94 = sphi 0, %s96
      %s97 = sphi 0, %s94
      %s98 = sphi 0, %s97
      %s114 = sphi 0, %s98
    $region4: #{tpu_custom_call.1} parent=1 // loop_header_branch
      %19 = sbr.rel (%p17) target = $region8
    $region5: #{tpu_custom_call.1} parent=1 // loop_body
      %s21 = ssub.s32 %s16, 1
      %s22 = ssub.s32 %s16, 2
      %s23 = sadd.s32 %s16, 1
      %s24 = ssub.s32 %s16, %s23
      %p25 = scmp.eq.s32.totalorder %s24, 0
      %s27 = sadd.s32 %s26, 1
      %s28 = scalar_select %p25, %s26, %s27
      %p31 = pneg %p25
      %p32 = scmp.eq.s32.totalorder %s16, 1
      %p33 = por %p31, %p32
      %p34 = scmp.ne.s32.totalorder %s26, %s29
      %p35 = scmp.eq.s32.totalorder %s16, 0
      %p36 = por %p34, %p35
      %p37 = scmp.ne.s32.totalorder %s26, %s29
      %p38 = scmp.eq.s32.totalorder %s21, 1
      %p39 = por %p37, %p38
      %p40 = scmp.ne.s32.totalorder %s29, %s30
      %p41 = scmp.eq.s32.totalorder %s21, 0
      %p42 = por %p40, %p41
      %p43 = scmp.ne.s32.totalorder %s29, %s30
      %p44 = scmp.eq.s32.totalorder %s22, 1
      %p45 = por %p43, %p44
      %p47 = scmp.ne.s32.totalorder %s30, %s46
      %p48 = scmp.eq.s32.totalorder %s22, 0
      %p49 = por %p47, %p48
      %s51 = sadd.s32 %s50, 1
      %p54 = scmp.eq.s32.totalorder %s16, 1
      %p55 = scmp.ne.s32.totalorder %s50, %s52
      %p56 = scmp.eq.s32.totalorder %s16, 0
      %p57 = por %p55, %p56
      %p58 = scmp.ne.s32.totalorder %s50, %s52
      %p59 = scmp.eq.s32.totalorder %s21, 1
      %p60 = por %p58, %p59
      %p61 = scmp.ne.s32.totalorder %s52, %s53
      %p62 = scmp.eq.s32.totalorder %s21, 0
      %p63 = por %p61, %p62
      %p64 = scmp.ne.s32.totalorder %s52, %s53
      %p65 = scmp.eq.s32.totalorder %s22, 1
      %p66 = por %p64, %p65
      %p68 = scmp.ne.s32.totalorder %s53, %s67
      %p69 = scmp.eq.s32.totalorder %s22, 0
      %p70 = por %p68, %p69
      %s72 = sadd.s32 %s71, 1
      %p75 = scmp.eq.s32.totalorder %s16, 1
      %p76 = scmp.ne.s32.totalorder %s71, %s73
      %p77 = scmp.eq.s32.totalorder %s16, 0
      %p78 = por %p76, %p77
      %p79 = scmp.ne.s32.totalorder %s71, %s73
      %p80 = scmp.eq.s32.totalorder %s21, 1
      %p81 = por %p79, %p80
      %p82 = scmp.ne.s32.totalorder %s73, %s74
      %p83 = scmp.eq.s32.totalorder %s21, 0
      %p84 = por %p82, %p83
      %p85 = scmp.ne.s32.totalorder %s73, %s74
      %p86 = scmp.eq.s32.totalorder %s22, 1
      %p87 = por %p85, %p86
      %p89 = scmp.ne.s32.totalorder %s74, %s88
      %p90 = scmp.eq.s32.totalorder %s22, 0
      %p91 = por %p89, %p90
      %s92 = ssub.s32 %s16, %s23
      %p93 = scmp.eq.s32.totalorder %s92, 0
      %s95 = sadd.s32 %s94, 1
      %s96 = scalar_select %p93, %s94, %s95
      %p99 = pneg %p93
      %p100 = scmp.eq.s32.totalorder %s16, 1
      %p101 = por %p99, %p100
      %p102 = scmp.ne.s32.totalorder %s94, %s97
      %p103 = scmp.eq.s32.totalorder %s16, 0
      %p104 = por %p102, %p103
      %p105 = scmp.ne.s32.totalorder %s94, %s97
      %p106 = scmp.eq.s32.totalorder %s21, 1
      %p107 = por %p105, %p106
      %p108 = scmp.ne.s32.totalorder %s97, %s98
      %p109 = scmp.eq.s32.totalorder %s21, 0
      %p110 = por %p108, %p109
      %p111 = scmp.ne.s32.totalorder %s97, %s98
      %p112 = scmp.eq.s32.totalorder %s22, 1
      %p113 = por %p111, %p112
      %p115 = scmp.ne.s32.totalorder %s98, %s114
      %p116 = scmp.eq.s32.totalorder %s22, 0
      %p117 = por %p115, %p116
      %p118 = scmp.le.s32.totalorder 1, %s16
      %p119 = scmp.lt.s32.totalorder %s16, 3
      %p120 = pnand %p118, %p119
      %p121 = pneg %p120
      // Predicated region
      $region9: #{tpu_custom_call.1} parent=5 // pred_check
        _
      $region10: #{tpu_custom_call.1} parent=5 // pred_check_branch
        %123 = sbr.rel (%p120) target = $region12
      $region11: #{tpu_custom_call.1} parent=5 // pred_region
        %s124 = ssub.s32 %s16, 1
        // Predicated region
        $region13: #{tpu_custom_call.1} parent=11 // pred_check
          %p125 = pneg %p63
        $region14: #{tpu_custom_call.1} parent=11 // pred_check_branch
          %127 = sbr.rel (%p125) target = $region16
        $region15: #{tpu_custom_call.1} parent=11 // pred_region
          %s129 = ssub.s32 128, 128
          %130 = vsyncadd [#allocation6], %s129
          %s132 = sshll.u32 [#allocation5], 4
          %s133 = int_to_ptr.vmem [resolvable:$true] %s132
          %135 = dma.hbm_to_vmem [thread:$0]  %s1, 128, %s133, [#allocation6]
        $region16: #{tpu_custom_call.1} parent=11 // pred_fallthru
          _
        // Predicated region
        $region17: #{tpu_custom_call.1} parent=11 // pred_check
          %p136 = pneg %p84
        $region18: #{tpu_custom_call.1} parent=11 // pred_check_branch
          %138 = sbr.rel (%p136) target = $region20
        $region19: #{tpu_custom_call.1} parent=11 // pred_region
          %s140 = ssub.s32 2688, 2688
          %141 = vsyncadd [#allocation6], %s140
          %s142 = sshll.u32 [#allocation7], 4
          %s143 = int_to_ptr.vmem [resolvable:$true] %s142
          %148 = dma.hbm_to_vmem [thread:$0]  %s2, 2688, %s143, [#allocation6], 128, 128, 8
        $region20: #{tpu_custom_call.1} parent=11 // pred_fallthru
          _
      $region12: #{tpu_custom_call.1} parent=5 // pred_fallthru
        _
      %p149 = scmp.lt.s32.totalorder %s16, 2
      // Predicated region
      $region21: #{tpu_custom_call.1} parent=5 // pred_check
        %p150 = pneg %p149
      $region22: #{tpu_custom_call.1} parent=5 // pred_check_branch
        %152 = sbr.rel (%p150) target = $region24
      $region23: #{tpu_custom_call.1} parent=5 // pred_region
        // Predicated region
        $region25: #{tpu_custom_call.1} parent=23 // pred_check
          %p153 = pneg %p36
        $region26: #{tpu_custom_call.1} parent=23 // pred_check_branch
          %155 = sbr.rel (%p153) target = $region28
        $region27: #{tpu_custom_call.1} parent=23 // pred_region
          %s156 = sand.u32 %s26, 1
          %s157 = scalar_lea.sflag [#allocation3], %s156
          %s158 = sand.u32 %s26, 1
          %s159 = smul.addr %s158, 8
          %s160 = scalar_lea.vmem [#allocation2], %s159
          %s162 = ssub.s32 128, 128
          %163 = vsyncadd %s157, %s162
          %s164 = smul.addr %s16, 128
          %s165 = scalar_lea.hbm %s0, %s164
          %s167 = sshll.u32 %s160, 4
          %s168 = int_to_ptr.vmem [resolvable:$true] %s167
          %170 = dma.hbm_to_vmem [thread:$0]  %s165, 128, %s168, %s157
        $region28: #{tpu_custom_call.1} parent=23 // pred_fallthru
          _
      $region24: #{tpu_custom_call.1} parent=5 // pred_fallthru
        _
      %p171 = scmp.le.s32.totalorder 1, %s16
      %p172 = scmp.lt.s32.totalorder %s16, 3
      %p173 = pnand %p171, %p172
      %p174 = pneg %p173
      // Predicated region
      $region29: #{tpu_custom_call.1} parent=5 // pred_check
        _
      $region30: #{tpu_custom_call.1} parent=5 // pred_check_branch
        %176 = sbr.rel (%p173) target = $region32
      $region31: #{tpu_custom_call.1} parent=5 // pred_region
        %s177 = ssub.s32 %s16, 1
        %s178 = sand.u32 %s29, 1
        %s179 = scalar_lea.sflag [#allocation3], %s178
        %s180 = sand.u32 %s29, 1
        %s181 = smul.addr %s180, 8
        %s182 = scalar_lea.vmem [#allocation2], %s181
        // Predicated region
        $region33: #{tpu_custom_call.1} parent=31 // pred_check
          %p183 = pneg %p42
        $region34: #{tpu_custom_call.1} parent=31 // pred_check_branch
          %185 = sbr.rel (%p183) target = $region36
        $region35: #{tpu_custom_call.1} parent=31 // pred_region
          %186 = dma.done %s179, 128
        $region36: #{tpu_custom_call.1} parent=31 // pred_fallthru
          _
        // Predicated region
        $region37: #{tpu_custom_call.1} parent=31 // pred_check
          %p187 = pneg %p63
        $region38: #{tpu_custom_call.1} parent=31 // pred_check_branch
          %189 = sbr.rel (%p187) target = $region40
        $region39: #{tpu_custom_call.1} parent=31 // pred_region
          %190 = dma.done [#allocation6], 128
        $region40: #{tpu_custom_call.1} parent=31 // pred_fallthru
          _
        // Predicated region
        $region41: #{tpu_custom_call.1} parent=31 // pred_check
          %p191 = pneg %p84
        $region42: #{tpu_custom_call.1} parent=31 // pred_check_branch
          %193 = sbr.rel (%p191) target = $region44
        $region43: #{tpu_custom_call.1} parent=31 // pred_region
          %194 = dma.done [#allocation6], 2688
        $region44: #{tpu_custom_call.1} parent=31 // pred_fallthru
          _
        %s195 = sand.u32 %s29, 1
        %s196 = scalar_lea.sflag [#allocation3], %s195
        %s197 = sand.u32 %s29, 1
        %s198 = smul.addr %s197, 8
        %s199 = scalar_lea.vmem [#allocation2], %s198
        %p200 = pneg %p42
        %p201 = pneg %p39
        %p202 = pneg %p63
        %p203 = pneg %p60
        %p204 = pneg %p84
        %p205 = pneg %p81
        %p206 = pneg %p110
        %p207 = pneg %p107
        %s208 = sand.u32 %s97, 1
        %s209 = scalar_lea.sflag [#allocation4], %s208
        %s210 = sand.u32 %s97, 1
        %s211 = smul.addr %s210, 8
        %s212 = scalar_lea.vmem [#allocation8], %s211
        %v213 = vld [vmem:[%s182] sm:$0xff]
        %v214 = vld [vmem:[#allocation5] sm:$0xff]
        %v215 = vld [vmem:[#allocation7] sm:$0xff]
        %v216 = vld [vmem:[#allocation7 + $0x8] sm:$0xff]
        %v217 = vld [vmem:[#allocation7 + $0x10] sm:$0xff]
        %v218 = vld [vmem:[#allocation7 + $0x18] sm:$0xff]
        %v219 = vld [vmem:[#allocation7 + $0xa0] sm:$0x1]
        %v220 = vlaneseq
        %v221 = vshrl.u32 %v220, 7
        %v222 = vsub.s32 0, %v221
        %v223 = vrot.slane %v219, %v222
        %vm224 = vcmask 261120
        %v226 = vsel %vm224, %v213, 0
        %228 = vmatprep.subr.mxu0 0.0
        %229 = vmatpush1.msra.mxu0 0.0
        %230 = vmatprep.subr.mxu0 0.0
        %231 = vmatpush1.msra.mxu0 0.0
        %232 = vmatprep.subr.mxu0 0.0
        %233 = vmatpush1.msra.mxu0 0.0
        %234 = vmatprep.subr.mxu0 0.0
        %235 = vmatpush1.msra.mxu0 0.0
        %236 = vmatprep.subr.mxu0 0.0
        %237 = vmatpush1.msra.mxu0 0.0
        %238 = vmatprep.subr.mxu0 0.0
        %239 = vmatpush1.msra.mxu0 0.0
        %240 = vmatprep.subr.mxu0 0.0
        %241 = vmatpush1.msra.mxu0 0.0
        %242 = vmatprep.subr.mxu0 0.0
        %243 = vmatpush1.msra.mxu0 0.0
        %244 = vmatprep.subr.mxu0 0.0
        %245 = vmatpush1.msra.mxu0 0.0
        %246 = vmatprep.subr.mxu0 0.0
        %247 = vmatpush1.msra.mxu0 0.0
        %248 = vmatprep.subr.mxu0 0.0
        %249 = vmatpush1.msra.mxu0 0.0
        %250 = vmatprep.subr.mxu0 0.0
        %251 = vmatpush1.msra.mxu0 0.0
        %252 = vmatprep.subr.mxu0 0.0
        %253 = vmatpush1.msra.mxu0 %v218
        %254 = vmatprep.subr.mxu0 0.0
        %255 = vmatpush1.msra.mxu0 %v217
        %256 = vmatprep.subr.mxu0 0.0
        %257 = vmatpush1.msra.mxu0 %v216
        %258 = vmatprep.subr.mxu0 0.0
        %259 = vmatpush1.msra.mxu0 %v215
        %260 = vmatprep.subr.mxu0 0.0
        %261 = vmatpush2.msra.mxu0 0.0
        %262 = vmatprep.subr.mxu0 0.0
        %263 = vmatpush2.msra.mxu0 0.0
        %264 = vmatprep.subr.mxu0 0.0
        %265 = vmatpush2.msra.mxu0 0.0
        %266 = vmatprep.subr.mxu0 0.0
        %267 = vmatpush2.msra.mxu0 0.0
        %268 = vmatprep.subr.mxu0 0.0
        %269 = vmatpush2.msra.mxu0 0.0
        %270 = vmatprep.subr.mxu0 0.0
        %271 = vmatpush2.msra.mxu0 0.0
        %272 = vmatprep.subr.mxu0 0.0
        %273 = vmatpush2.msra.mxu0 0.0
        %274 = vmatprep.subr.mxu0 0.0
        %275 = vmatpush2.msra.mxu0 0.0
        %276 = vmatprep.subr.mxu0 0.0
        %277 = vmatpush2.msra.mxu0 0.0
        %278 = vmatprep.subr.mxu0 0.0
        %279 = vmatpush2.msra.mxu0 0.0
        %280 = vmatprep.subr.mxu0 0.0
        %281 = vmatpush2.msra.mxu0 0.0
        %282 = vmatprep.subr.mxu0 0.0
        %283 = vmatpush2.msra.mxu0 0.0
        %284 = vmatprep.subr.mxu0 0.0
        %285 = vmatpush2.msra.mxu0 0.0
        %286 = vmatprep.subr.mxu0 0.0
        %287 = vmatpush2.msra.mxu0 0.0
        %288 = vmatprep.subr.mxu0 0.0
        %289 = vmatpush2.msra.mxu0 0.0
        %290 = vmatprep.subr.mxu0 0.0
        %291 = vmatpush2.msra.mxu0 0.0
        %292 = vmatprep.mubr.f32.mxu0 0.0
        %293 = vmatmul.mubr.f32.gmra.mxu0 %v226
        %v294 = vpop.f32.mrf.mxu0
        %v295 = vadd.f32 %v223, %v294
        %v296 = vpop.f32.mrf.mxu0
        %297 = vdwg.mxu0
        %299 = vrot.lane.b32.xlu0 %v295, 96
        %v300 = vpop.permute.xlu0 %299
        %vm301 = vcmask 64512
        %v302 = vsel %vm301, %v295, 0
        %v304 = vsel %vm301, %v300, 0
        %306 = vmatprep.subr.mxu0 0.0
        %307 = vmatpush1.xpose.msra.mxu0 0.0
        %308 = vmatprep.subr.mxu0 0.0
        %309 = vmatpush1.xpose.msra.mxu0 0.0
        %310 = vmatprep.subr.mxu0 0.0
        %311 = vmatpush1.xpose.msra.mxu0 0.0
        %312 = vmatprep.subr.mxu0 0.0
        %313 = vmatpush1.xpose.msra.mxu0 0.0
        %314 = vmatprep.subr.mxu0 0.0
        %315 = vmatpush1.xpose.msra.mxu0 0.0
        %316 = vmatprep.subr.mxu0 0.0
        %317 = vmatpush1.xpose.msra.mxu0 0.0
        %318 = vmatprep.subr.mxu0 0.0
        %319 = vmatpush1.xpose.msra.mxu0 0.0
        %320 = vmatprep.subr.mxu0 0.0
        %321 = vmatpush1.xpose.msra.mxu0 0.0
        %322 = vmatprep.subr.mxu0 0.0
        %323 = vmatpush1.xpose.msra.mxu0 0.0
        %324 = vmatprep.subr.mxu0 0.0
        %325 = vmatpush1.xpose.msra.mxu0 0.0
        %326 = vmatprep.subr.mxu0 0.0
        %327 = vmatpush1.xpose.msra.mxu0 0.0
        %328 = vmatprep.subr.mxu0 0.0
        %329 = vmatpush1.xpose.msra.mxu0 0.0
        %330 = vmatprep.subr.mxu0 0.0
        %331 = vmatpush1.xpose.msra.mxu0 0.0
        %332 = vmatprep.subr.mxu0 0.0
        %333 = vmatpush1.xpose.msra.mxu0 0.0
        %334 = vmatprep.subr.mxu0 0.0
        %335 = vmatpush1.xpose.msra.mxu0 0.0
        %336 = vmatprep.subr.mxu0 0.0
        %337 = vmatpush1.xpose.msra.mxu0 %v304
        %338 = vmatprep.subr.mxu0 0.0
        %339 = vmatpush2.xpose.msra.mxu0 0.0
        %340 = vmatprep.subr.mxu0 0.0
        %341 = vmatpush2.xpose.msra.mxu0 0.0
        %342 = vmatprep.subr.mxu0 0.0
        %343 = vmatpush2.xpose.msra.mxu0 0.0
        %344 = vmatprep.subr.mxu0 0.0
        %345 = vmatpush2.xpose.msra.mxu0 0.0
        %346 = vmatprep.subr.mxu0 0.0
        %347 = vmatpush2.xpose.msra.mxu0 0.0
        %348 = vmatprep.subr.mxu0 0.0
        %349 = vmatpush2.xpose.msra.mxu0 0.0
        %350 = vmatprep.subr.mxu0 0.0
        %351 = vmatpush2.xpose.msra.mxu0 0.0
        %352 = vmatprep.subr.mxu0 0.0
        %353 = vmatpush2.xpose.msra.mxu0 0.0
        %354 = vmatprep.subr.mxu0 0.0
        %355 = vmatpush2.xpose.msra.mxu0 0.0
        %356 = vmatprep.subr.mxu0 0.0
        %357 = vmatpush2.xpose.msra.mxu0 0.0
        %358 = vmatprep.subr.mxu0 0.0
        %359 = vmatpush2.xpose.msra.mxu0 0.0
        %360 = vmatprep.subr.mxu0 0.0
        %361 = vmatpush2.xpose.msra.mxu0 0.0
        %362 = vmatprep.subr.mxu0 0.0
        %363 = vmatpush2.xpose.msra.mxu0 0.0
        %364 = vmatprep.subr.mxu0 0.0
        %365 = vmatpush2.xpose.msra.mxu0 0.0
        %366 = vmatprep.subr.mxu0 0.0
        %367 = vmatpush2.xpose.msra.mxu0 0.0
        %368 = vmatprep.subr.mxu0 0.0
        %369 = vmatpush2.xpose.msra.mxu0 0.0
        %370 = vmatprep.mubr.f32.mxu0 0.0
        %371 = vmatmul.mubr.f32.gmra.mxu0 %v302
        %v372 = vpop.f32.mrf.mxu0
        %v373 = vadd.f32 %v214, %v372
        %v374 = vpop.f32.mrf.mxu0
        %375 = vdwg.mxu0
        %v376 = vsel %vm301, %v373, -inf
        %377 = vmax.xlane.f32.xlu0 %v376
        %v378 = vpop.xlane.xlu0 %377
        %v379 = vsub.f32 %v373, %v378
        %v380 = vmul.f32 %v379, 1.442695
        %v381 = vpow.pop %v380
        %v382 = vsel %vm301, %v381, 0.0
        %383 = vadd.xlane.f32.xlu0 %v382
        %v384 = vpop.xlane.xlu0 %383
        %v385 = vrcp.pop %v384
        %v386 = vmul.f32 %v381, %v385
        %387 = vrot.lane.b32.xlu0 %v295, 64
        %v388 = vpop.permute.xlu0 %387
        %v391 = vsel %vm301, %v386, 0
        %393 = vmatprep.subr.mxu0 0.0
        %394 = vmatpush1.msra.mxu0 0.0
        %395 = vmatprep.subr.mxu0 0.0
        %396 = vmatpush1.msra.mxu0 0.0
        %397 = vmatprep.subr.mxu0 0.0
        %398 = vmatpush1.msra.mxu0 0.0
        %399 = vmatprep.subr.mxu0 0.0
        %400 = vmatpush1.msra.mxu0 0.0
        %401 = vmatprep.subr.mxu0 0.0
        %402 = vmatpush1.msra.mxu0 0.0
        %403 = vmatprep.subr.mxu0 0.0
        %404 = vmatpush1.msra.mxu0 0.0
        %405 = vmatprep.subr.mxu0 0.0
        %406 = vmatpush1.msra.mxu0 0.0
        %407 = vmatprep.subr.mxu0 0.0
        %408 = vmatpush1.msra.mxu0 0.0
        %409 = vmatprep.subr.mxu0 0.0
        %410 = vmatpush1.msra.mxu0 0.0
        %411 = vmatprep.subr.mxu0 0.0
        %412 = vmatpush1.msra.mxu0 0.0
        %413 = vmatprep.subr.mxu0 0.0
        %414 = vmatpush1.msra.mxu0 0.0
        %415 = vmatprep.subr.mxu0 0.0
        %416 = vmatpush1.msra.mxu0 0.0
        %417 = vmatprep.subr.mxu0 0.0
        %418 = vmatpush1.msra.mxu0 0.0
        %419 = vmatprep.subr.mxu0 0.0
        %420 = vmatpush1.msra.mxu0 0.0
        %421 = vmatprep.subr.mxu0 0.0
        %422 = vmatpush1.msra.mxu0 0.0
        %423 = vmatprep.subr.mxu0 0.0
        %424 = vmatpush1.msra.mxu0 %v388
        %425 = vmatprep.subr.mxu0 0.0
        %426 = vmatpush2.msra.mxu0 0.0
        %427 = vmatprep.subr.mxu0 0.0
        %428 = vmatpush2.msra.mxu0 0.0
        %429 = vmatprep.subr.mxu0 0.0
        %430 = vmatpush2.msra.mxu0 0.0
        %431 = vmatprep.subr.mxu0 0.0
        %432 = vmatpush2.msra.mxu0 0.0
        %433 = vmatprep.subr.mxu0 0.0
        %434 = vmatpush2.msra.mxu0 0.0
        %435 = vmatprep.subr.mxu0 0.0
        %436 = vmatpush2.msra.mxu0 0.0
        %437 = vmatprep.subr.mxu0 0.0
        %438 = vmatpush2.msra.mxu0 0.0
        %439 = vmatprep.subr.mxu0 0.0
        %440 = vmatpush2.msra.mxu0 0.0
        %441 = vmatprep.subr.mxu0 0.0
        %442 = vmatpush2.msra.mxu0 0.0
        %443 = vmatprep.subr.mxu0 0.0
        %444 = vmatpush2.msra.mxu0 0.0
        %445 = vmatprep.subr.mxu0 0.0
        %446 = vmatpush2.msra.mxu0 0.0
        %447 = vmatprep.subr.mxu0 0.0
        %448 = vmatpush2.msra.mxu0 0.0
        %449 = vmatprep.subr.mxu0 0.0
        %450 = vmatpush2.msra.mxu0 0.0
        %451 = vmatprep.subr.mxu0 0.0
        %452 = vmatpush2.msra.mxu0 0.0
        %453 = vmatprep.subr.mxu0 0.0
        %454 = vmatpush2.msra.mxu0 0.0
        %455 = vmatprep.subr.mxu0 0.0
        %456 = vmatpush2.msra.mxu0 0.0
        %457 = vmatprep.mubr.f32.mxu0 0.0
        %458 = vmatmul.mubr.f32.gmra.mxu0 %v391
        %v459 = vpop.f32.mrf.mxu0
        %v460 = vadd.f32 0.0, %v459
        %v461 = vpop.f32.mrf.mxu0
        %462 = vdwg.mxu0
        %463 = vrot.lane.b32.xlu0 %v295, 120
        %v464 = vpop.permute.xlu0 %463
        %465 = vrot.lane.b32.xlu0 %v295, 88
        %v466 = vpop.permute.xlu0 %465
        %v467 = vsel %vm301, %v464, 0
        %v469 = vsel %vm301, %v466, 0
        %471 = vmatprep.subr.mxu0 0.0
        %472 = vmatpush1.xpose.msra.mxu0 0.0
        %473 = vmatprep.subr.mxu0 0.0
        %474 = vmatpush1.xpose.msra.mxu0 0.0
        %475 = vmatprep.subr.mxu0 0.0
        %476 = vmatpush1.xpose.msra.mxu0 0.0
        %477 = vmatprep.subr.mxu0 0.0
        %478 = vmatpush1.xpose.msra.mxu0 0.0
        %479 = vmatprep.subr.mxu0 0.0
        %480 = vmatpush1.xpose.msra.mxu0 0.0
        %481 = vmatprep.subr.mxu0 0.0
        %482 = vmatpush1.xpose.msra.mxu0 0.0
        %483 = vmatprep.subr.mxu0 0.0
        %484 = vmatpush1.xpose.msra.mxu0 0.0
        %485 = vmatprep.subr.mxu0 0.0
        %486 = vmatpush1.xpose.msra.mxu0 0.0
        %487 = vmatprep.subr.mxu0 0.0
        %488 = vmatpush1.xpose.msra.mxu0 0.0
        %489 = vmatprep.subr.mxu0 0.0
        %490 = vmatpush1.xpose.msra.mxu0 0.0
        %491 = vmatprep.subr.mxu0 0.0
        %492 = vmatpush1.xpose.msra.mxu0 0.0
        %493 = vmatprep.subr.mxu0 0.0
        %494 = vmatpush1.xpose.msra.mxu0 0.0
        %495 = vmatprep.subr.mxu0 0.0
        %496 = vmatpush1.xpose.msra.mxu0 0.0
        %497 = vmatprep.subr.mxu0 0.0
        %498 = vmatpush1.xpose.msra.mxu0 0.0
        %499 = vmatprep.subr.mxu0 0.0
        %500 = vmatpush1.xpose.msra.mxu0 0.0
        %501 = vmatprep.subr.mxu0 0.0
        %502 = vmatpush1.xpose.msra.mxu0 %v469
        %503 = vmatprep.subr.mxu0 0.0
        %504 = vmatpush2.xpose.msra.mxu0 0.0
        %505 = vmatprep.subr.mxu0 0.0
        %506 = vmatpush2.xpose.msra.mxu0 0.0
        %507 = vmatprep.subr.mxu0 0.0
        %508 = vmatpush2.xpose.msra.mxu0 0.0
        %509 = vmatprep.subr.mxu0 0.0
        %510 = vmatpush2.xpose.msra.mxu0 0.0
        %511 = vmatprep.subr.mxu0 0.0
        %512 = vmatpush2.xpose.msra.mxu0 0.0
        %513 = vmatprep.subr.mxu0 0.0
        %514 = vmatpush2.xpose.msra.mxu0 0.0
        %515 = vmatprep.subr.mxu0 0.0
        %516 = vmatpush2.xpose.msra.mxu0 0.0
        %517 = vmatprep.subr.mxu0 0.0
        %518 = vmatpush2.xpose.msra.mxu0 0.0
        %519 = vmatprep.subr.mxu0 0.0
        %520 = vmatpush2.xpose.msra.mxu0 0.0
        %521 = vmatprep.subr.mxu0 0.0
        %522 = vmatpush2.xpose.msra.mxu0 0.0
        %523 = vmatprep.subr.mxu0 0.0
        %524 = vmatpush2.xpose.msra.mxu0 0.0
        %525 = vmatprep.subr.mxu0 0.0
        %526 = vmatpush2.xpose.msra.mxu0 0.0
        %527 = vmatprep.subr.mxu0 0.0
        %528 = vmatpush2.xpose.msra.mxu0 0.0
        %529 = vmatprep.subr.mxu0 0.0
        %530 = vmatpush2.xpose.msra.mxu0 0.0
        %531 = vmatprep.subr.mxu0 0.0
        %532 = vmatpush2.xpose.msra.mxu0 0.0
        %533 = vmatprep.subr.mxu0 0.0
        %534 = vmatpush2.xpose.msra.mxu0 0.0
        %535 = vmatprep.mubr.f32.mxu0 0.0
        %536 = vmatmul.mubr.f32.gmra.mxu0 %v467
        %v537 = vpop.f32.mrf.mxu0
        %v538 = vadd.f32 %v214, %v537
        %v539 = vpop.f32.mrf.mxu0
        %540 = vdwg.mxu0
        %v541 = vsel %vm301, %v538, -inf
        %542 = vmax.xlane.f32.xlu0 %v541
        %v543 = vpop.xlane.xlu0 %542
        %v544 = vsub.f32 %v538, %v543
        %v545 = vmul.f32 %v544, 1.442695
        %v546 = vpow.pop %v545
        %v547 = vsel %vm301, %v546, 0.0
        %548 = vadd.xlane.f32.xlu0 %v547
        %v549 = vpop.xlane.xlu0 %548
        %v550 = vrcp.pop %v549
        %v551 = vmul.f32 %v546, %v550
        %552 = vrot.lane.b32.xlu0 %v295, 56
        %v553 = vpop.permute.xlu0 %552
        %v556 = vsel %vm301, %v551, 0
        %558 = vmatprep.subr.mxu0 0.0
        %559 = vmatpush1.msra.mxu0 0.0
        %560 = vmatprep.subr.mxu0 0.0
        %561 = vmatpush1.msra.mxu0 0.0
        %562 = vmatprep.subr.mxu0 0.0
        %563 = vmatpush1.msra.mxu0 0.0
        %564 = vmatprep.subr.mxu0 0.0
        %565 = vmatpush1.msra.mxu0 0.0
        %566 = vmatprep.subr.mxu0 0.0
        %567 = vmatpush1.msra.mxu0 0.0
        %568 = vmatprep.subr.mxu0 0.0
        %569 = vmatpush1.msra.mxu0 0.0
        %570 = vmatprep.subr.mxu0 0.0
        %571 = vmatpush1.msra.mxu0 0.0
        %572 = vmatprep.subr.mxu0 0.0
        %573 = vmatpush1.msra.mxu0 0.0
        %574 = vmatprep.subr.mxu0 0.0
        %575 = vmatpush1.msra.mxu0 0.0
        %576 = vmatprep.subr.mxu0 0.0
        %577 = vmatpush1.msra.mxu0 0.0
        %578 = vmatprep.subr.mxu0 0.0
        %579 = vmatpush1.msra.mxu0 0.0
        %580 = vmatprep.subr.mxu0 0.0
        %581 = vmatpush1.msra.mxu0 0.0
        %582 = vmatprep.subr.mxu0 0.0
        %583 = vmatpush1.msra.mxu0 0.0
        %584 = vmatprep.subr.mxu0 0.0
        %585 = vmatpush1.msra.mxu0 0.0
        %586 = vmatprep.subr.mxu0 0.0
        %587 = vmatpush1.msra.mxu0 0.0
        %588 = vmatprep.subr.mxu0 0.0
        %589 = vmatpush1.msra.mxu0 %v553
        %590 = vmatprep.subr.mxu0 0.0
        %591 = vmatpush2.msra.mxu0 0.0
        %592 = vmatprep.subr.mxu0 0.0
        %593 = vmatpush2.msra.mxu0 0.0
        %594 = vmatprep.subr.mxu0 0.0
        %595 = vmatpush2.msra.mxu0 0.0
        %596 = vmatprep.subr.mxu0 0.0
        %597 = vmatpush2.msra.mxu0 0.0
        %598 = vmatprep.subr.mxu0 0.0
        %599 = vmatpush2.msra.mxu0 0.0
        %600 = vmatprep.subr.mxu0 0.0
        %601 = vmatpush2.msra.mxu0 0.0
        %602 = vmatprep.subr.mxu0 0.0
        %603 = vmatpush2.msra.mxu0 0.0
        %604 = vmatprep.subr.mxu0 0.0
        %605 = vmatpush2.msra.mxu0 0.0
        %606 = vmatprep.subr.mxu0 0.0
        %607 = vmatpush2.msra.mxu0 0.0
        %608 = vmatprep.subr.mxu0 0.0
        %609 = vmatpush2.msra.mxu0 0.0
        %610 = vmatprep.subr.mxu0 0.0
        %611 = vmatpush2.msra.mxu0 0.0
        %612 = vmatprep.subr.mxu0 0.0
        %613 = vmatpush2.msra.mxu0 0.0
        %614 = vmatprep.subr.mxu0 0.0
        %615 = vmatpush2.msra.mxu0 0.0
        %616 = vmatprep.subr.mxu0 0.0
        %617 = vmatpush2.msra.mxu0 0.0
        %618 = vmatprep.subr.mxu0 0.0
        %619 = vmatpush2.msra.mxu0 0.0
        %620 = vmatprep.subr.mxu0 0.0
        %621 = vmatpush2.msra.mxu0 0.0
        %622 = vmatprep.mubr.f32.mxu0 0.0
        %623 = vmatmul.mubr.f32.gmra.mxu0 %v556
        %v624 = vpop.f32.mrf.mxu0
        %v625 = vadd.f32 0.0, %v624
        %v626 = vpop.f32.mrf.mxu0
        %627 = vdwg.mxu0
        %628 = vrot.lane.b32.xlu0 %v295, 112
        %v629 = vpop.permute.xlu0 %628
        %630 = vrot.lane.b32.xlu0 %v295, 80
        %v631 = vpop.permute.xlu0 %630
        %v632 = vsel %vm301, %v629, 0
        %v634 = vsel %vm301, %v631, 0
        %636 = vmatprep.subr.mxu0 0.0
        %637 = vmatpush1.xpose.msra.mxu0 0.0
        %638 = vmatprep.subr.mxu0 0.0
        %639 = vmatpush1.xpose.msra.mxu0 0.0
        %640 = vmatprep.subr.mxu0 0.0
        %641 = vmatpush1.xpose.msra.mxu0 0.0
        %642 = vmatprep.subr.mxu0 0.0
        %643 = vmatpush1.xpose.msra.mxu0 0.0
        %644 = vmatprep.subr.mxu0 0.0
        %645 = vmatpush1.xpose.msra.mxu0 0.0
        %646 = vmatprep.subr.mxu0 0.0
        %647 = vmatpush1.xpose.msra.mxu0 0.0
        %648 = vmatprep.subr.mxu0 0.0
        %649 = vmatpush1.xpose.msra.mxu0 0.0
        %650 = vmatprep.subr.mxu0 0.0
        %651 = vmatpush1.xpose.msra.mxu0 0.0
        %652 = vmatprep.subr.mxu0 0.0
        %653 = vmatpush1.xpose.msra.mxu0 0.0
        %654 = vmatprep.subr.mxu0 0.0
        %655 = vmatpush1.xpose.msra.mxu0 0.0
        %656 = vmatprep.subr.mxu0 0.0
        %657 = vmatpush1.xpose.msra.mxu0 0.0
        %658 = vmatprep.subr.mxu0 0.0
        %659 = vmatpush1.xpose.msra.mxu0 0.0
        %660 = vmatprep.subr.mxu0 0.0
        %661 = vmatpush1.xpose.msra.mxu0 0.0
        %662 = vmatprep.subr.mxu0 0.0
        %663 = vmatpush1.xpose.msra.mxu0 0.0
        %664 = vmatprep.subr.mxu0 0.0
        %665 = vmatpush1.xpose.msra.mxu0 0.0
        %666 = vmatprep.subr.mxu0 0.0
        %667 = vmatpush1.xpose.msra.mxu0 %v634
        %668 = vmatprep.subr.mxu0 0.0
        %669 = vmatpush2.xpose.msra.mxu0 0.0
        %670 = vmatprep.subr.mxu0 0.0
        %671 = vmatpush2.xpose.msra.mxu0 0.0
        %672 = vmatprep.subr.mxu0 0.0
        %673 = vmatpush2.xpose.msra.mxu0 0.0
        %674 = vmatprep.subr.mxu0 0.0
        %675 = vmatpush2.xpose.msra.mxu0 0.0
        %676 = vmatprep.subr.mxu0 0.0
        %677 = vmatpush2.xpose.msra.mxu0 0.0
        %678 = vmatprep.subr.mxu0 0.0
        %679 = vmatpush2.xpose.msra.mxu0 0.0
        %680 = vmatprep.subr.mxu0 0.0
        %681 = vmatpush2.xpose.msra.mxu0 0.0
        %682 = vmatprep.subr.mxu0 0.0
        %683 = vmatpush2.xpose.msra.mxu0 0.0
        %684 = vmatprep.subr.mxu0 0.0
        %685 = vmatpush2.xpose.msra.mxu0 0.0
        %686 = vmatprep.subr.mxu0 0.0
        %687 = vmatpush2.xpose.msra.mxu0 0.0
        %688 = vmatprep.subr.mxu0 0.0
        %689 = vmatpush2.xpose.msra.mxu0 0.0
        %690 = vmatprep.subr.mxu0 0.0
        %691 = vmatpush2.xpose.msra.mxu0 0.0
        %692 = vmatprep.subr.mxu0 0.0
        %693 = vmatpush2.xpose.msra.mxu0 0.0
        %694 = vmatprep.subr.mxu0 0.0
        %695 = vmatpush2.xpose.msra.mxu0 0.0
        %696 = vmatprep.subr.mxu0 0.0
        %697 = vmatpush2.xpose.msra.mxu0 0.0
        %698 = vmatprep.subr.mxu0 0.0
        %699 = vmatpush2.xpose.msra.mxu0 0.0
        %700 = vmatprep.mubr.f32.mxu0 0.0
        %701 = vmatmul.mubr.f32.gmra.mxu0 %v632
        %v702 = vpop.f32.mrf.mxu0
        %v703 = vadd.f32 %v214, %v702
        %v704 = vpop.f32.mrf.mxu0
        %705 = vdwg.mxu0
        %v706 = vsel %vm301, %v703, -inf
        %707 = vmax.xlane.f32.xlu0 %v706
        %v708 = vpop.xlane.xlu0 %707
        %v709 = vsub.f32 %v703, %v708
        %v710 = vmul.f32 %v709, 1.442695
        %v711 = vpow.pop %v710
        %v712 = vsel %vm301, %v711, 0.0
        %713 = vadd.xlane.f32.xlu0 %v712
        %v714 = vpop.xlane.xlu0 %713
        %v715 = vrcp.pop %v714
        %v716 = vmul.f32 %v711, %v715
        %717 = vrot.lane.b32.xlu0 %v295, 48
        %v718 = vpop.permute.xlu0 %717
        %v721 = vsel %vm301, %v716, 0
        %723 = vmatprep.subr.mxu0 0.0
        %724 = vmatpush1.msra.mxu0 0.0
        %725 = vmatprep.subr.mxu0 0.0
        %726 = vmatpush1.msra.mxu0 0.0
        %727 = vmatprep.subr.mxu0 0.0
        %728 = vmatpush1.msra.mxu0 0.0
        %729 = vmatprep.subr.mxu0 0.0
        %730 = vmatpush1.msra.mxu0 0.0
        %731 = vmatprep.subr.mxu0 0.0
        %732 = vmatpush1.msra.mxu0 0.0
        %733 = vmatprep.subr.mxu0 0.0
        %734 = vmatpush1.msra.mxu0 0.0
        %735 = vmatprep.subr.mxu0 0.0
        %736 = vmatpush1.msra.mxu0 0.0
        %737 = vmatprep.subr.mxu0 0.0
        %738 = vmatpush1.msra.mxu0 0.0
        %739 = vmatprep.subr.mxu0 0.0
        %740 = vmatpush1.msra.mxu0 0.0
        %741 = vmatprep.subr.mxu0 0.0
        %742 = vmatpush1.msra.mxu0 0.0
        %743 = vmatprep.subr.mxu0 0.0
        %744 = vmatpush1.msra.mxu0 0.0
        %745 = vmatprep.subr.mxu0 0.0
        %746 = vmatpush1.msra.mxu0 0.0
        %747 = vmatprep.subr.mxu0 0.0
        %748 = vmatpush1.msra.mxu0 0.0
        %749 = vmatprep.subr.mxu0 0.0
        %750 = vmatpush1.msra.mxu0 0.0
        %751 = vmatprep.subr.mxu0 0.0
        %752 = vmatpush1.msra.mxu0 0.0
        %753 = vmatprep.subr.mxu0 0.0
        %754 = vmatpush1.msra.mxu0 %v718
        %755 = vmatprep.subr.mxu0 0.0
        %756 = vmatpush2.msra.mxu0 0.0
        %757 = vmatprep.subr.mxu0 0.0
        %758 = vmatpush2.msra.mxu0 0.0
        %759 = vmatprep.subr.mxu0 0.0
        %760 = vmatpush2.msra.mxu0 0.0
        %761 = vmatprep.subr.mxu0 0.0
        %762 = vmatpush2.msra.mxu0 0.0
        %763 = vmatprep.subr.mxu0 0.0
        %764 = vmatpush2.msra.mxu0 0.0
        %765 = vmatprep.subr.mxu0 0.0
        %766 = vmatpush2.msra.mxu0 0.0
        %767 = vmatprep.subr.mxu0 0.0
        %768 = vmatpush2.msra.mxu0 0.0
        %769 = vmatprep.subr.mxu0 0.0
        %770 = vmatpush2.msra.mxu0 0.0
        %771 = vmatprep.subr.mxu0 0.0
        %772 = vmatpush2.msra.mxu0 0.0
        %773 = vmatprep.subr.mxu0 0.0
        %774 = vmatpush2.msra.mxu0 0.0
        %775 = vmatprep.subr.mxu0 0.0
        %776 = vmatpush2.msra.mxu0 0.0
        %777 = vmatprep.subr.mxu0 0.0
        %778 = vmatpush2.msra.mxu0 0.0
        %779 = vmatprep.subr.mxu0 0.0
        %780 = vmatpush2.msra.mxu0 0.0
        %781 = vmatprep.subr.mxu0 0.0
        %782 = vmatpush2.msra.mxu0 0.0
        %783 = vmatprep.subr.mxu0 0.0
        %784 = vmatpush2.msra.mxu0 0.0
        %785 = vmatprep.subr.mxu0 0.0
        %786 = vmatpush2.msra.mxu0 0.0
        %787 = vmatprep.mubr.f32.mxu0 0.0
        %788 = vmatmul.mubr.f32.gmra.mxu0 %v721
        %v789 = vpop.f32.mrf.mxu0
        %v790 = vadd.f32 0.0, %v789
        %v791 = vpop.f32.mrf.mxu0
        %792 = vdwg.mxu0
        %793 = vrot.lane.b32.xlu0 %v295, 104
        %v794 = vpop.permute.xlu0 %793
        %795 = vrot.lane.b32.xlu0 %v295, 72
        %v796 = vpop.permute.xlu0 %795
        %v797 = vsel %vm301, %v794, 0
        %v799 = vsel %vm301, %v796, 0
        %801 = vmatprep.subr.mxu0 0.0
        %802 = vmatpush1.xpose.msra.mxu0 0.0
        %803 = vmatprep.subr.mxu0 0.0
        %804 = vmatpush1.xpose.msra.mxu0 0.0
        %805 = vmatprep.subr.mxu0 0.0
        %806 = vmatpush1.xpose.msra.mxu0 0.0
        %807 = vmatprep.subr.mxu0 0.0
        %808 = vmatpush1.xpose.msra.mxu0 0.0
        %809 = vmatprep.subr.mxu0 0.0
        %810 = vmatpush1.xpose.msra.mxu0 0.0
        %811 = vmatprep.subr.mxu0 0.0
        %812 = vmatpush1.xpose.msra.mxu0 0.0
        %813 = vmatprep.subr.mxu0 0.0
        %814 = vmatpush1.xpose.msra.mxu0 0.0
        %815 = vmatprep.subr.mxu0 0.0
        %816 = vmatpush1.xpose.msra.mxu0 0.0
        %817 = vmatprep.subr.mxu0 0.0
        %818 = vmatpush1.xpose.msra.mxu0 0.0
        %819 = vmatprep.subr.mxu0 0.0
        %820 = vmatpush1.xpose.msra.mxu0 0.0
        %821 = vmatprep.subr.mxu0 0.0
        %822 = vmatpush1.xpose.msra.mxu0 0.0
        %823 = vmatprep.subr.mxu0 0.0
        %824 = vmatpush1.xpose.msra.mxu0 0.0
        %825 = vmatprep.subr.mxu0 0.0
        %826 = vmatpush1.xpose.msra.mxu0 0.0
        %827 = vmatprep.subr.mxu0 0.0
        %828 = vmatpush1.xpose.msra.mxu0 0.0
        %829 = vmatprep.subr.mxu0 0.0
        %830 = vmatpush1.xpose.msra.mxu0 0.0
        %831 = vmatprep.subr.mxu0 0.0
        %832 = vmatpush1.xpose.msra.mxu0 %v799
        %833 = vmatprep.subr.mxu0 0.0
        %834 = vmatpush2.xpose.msra.mxu0 0.0
        %835 = vmatprep.subr.mxu0 0.0
        %836 = vmatpush2.xpose.msra.mxu0 0.0
        %837 = vmatprep.subr.mxu0 0.0
        %838 = vmatpush2.xpose.msra.mxu0 0.0
        %839 = vmatprep.subr.mxu0 0.0
        %840 = vmatpush2.xpose.msra.mxu0 0.0
        %841 = vmatprep.subr.mxu0 0.0
        %842 = vmatpush2.xpose.msra.mxu0 0.0
        %843 = vmatprep.subr.mxu0 0.0
        %844 = vmatpush2.xpose.msra.mxu0 0.0
        %845 = vmatprep.subr.mxu0 0.0
        %846 = vmatpush2.xpose.msra.mxu0 0.0
        %847 = vmatprep.subr.mxu0 0.0
        %848 = vmatpush2.xpose.msra.mxu0 0.0
        %849 = vmatprep.subr.mxu0 0.0
        %850 = vmatpush2.xpose.msra.mxu0 0.0
        %851 = vmatprep.subr.mxu0 0.0
        %852 = vmatpush2.xpose.msra.mxu0 0.0
        %853 = vmatprep.subr.mxu0 0.0
        %854 = vmatpush2.xpose.msra.mxu0 0.0
        %855 = vmatprep.subr.mxu0 0.0
        %856 = vmatpush2.xpose.msra.mxu0 0.0
        %857 = vmatprep.subr.mxu0 0.0
        %858 = vmatpush2.xpose.msra.mxu0 0.0
        %859 = vmatprep.subr.mxu0 0.0
        %860 = vmatpush2.xpose.msra.mxu0 0.0
        %861 = vmatprep.subr.mxu0 0.0
        %862 = vmatpush2.xpose.msra.mxu0 0.0
        %863 = vmatprep.subr.mxu0 0.0
        %864 = vmatpush2.xpose.msra.mxu0 0.0
        %865 = vmatprep.mubr.f32.mxu0 0.0
        %866 = vmatmul.mubr.f32.gmra.mxu0 %v797
        %v867 = vpop.f32.mrf.mxu0
        %v868 = vadd.f32 %v214, %v867
        %v869 = vpop.f32.mrf.mxu0
        %870 = vdwg.mxu0
        %v871 = vsel %vm301, %v868, -inf
        %872 = vmax.xlane.f32.xlu0 %v871
        %v873 = vpop.xlane.xlu0 %872
        %v874 = vsub.f32 %v868, %v873
        %v875 = vmul.f32 %v874, 1.442695
        %v876 = vpow.pop %v875
        %v877 = vsel %vm301, %v876, 0.0
        %878 = vadd.xlane.f32.xlu0 %v877
        %v879 = vpop.xlane.xlu0 %878
        %v880 = vrcp.pop %v879
        %v881 = vmul.f32 %v876, %v880
        %882 = vrot.lane.b32.xlu0 %v295, 40
        %v883 = vpop.permute.xlu0 %882
        %v886 = vsel %vm301, %v881, 0
        %888 = vmatprep.subr.mxu0 0.0
        %889 = vmatpush1.msra.mxu0 0.0
        %890 = vmatprep.subr.mxu0 0.0
        %891 = vmatpush1.msra.mxu0 0.0
        %892 = vmatprep.subr.mxu0 0.0
        %893 = vmatpush1.msra.mxu0 0.0
        %894 = vmatprep.subr.mxu0 0.0
        %895 = vmatpush1.msra.mxu0 0.0
        %896 = vmatprep.subr.mxu0 0.0
        %897 = vmatpush1.msra.mxu0 0.0
        %898 = vmatprep.subr.mxu0 0.0
        %899 = vmatpush1.msra.mxu0 0.0
        %900 = vmatprep.subr.mxu0 0.0
        %901 = vmatpush1.msra.mxu0 0.0
        %902 = vmatprep.subr.mxu0 0.0
        %903 = vmatpush1.msra.mxu0 0.0
        %904 = vmatprep.subr.mxu0 0.0
        %905 = vmatpush1.msra.mxu0 0.0
        %906 = vmatprep.subr.mxu0 0.0
        %907 = vmatpush1.msra.mxu0 0.0
        %908 = vmatprep.subr.mxu0 0.0
        %909 = vmatpush1.msra.mxu0 0.0
        %910 = vmatprep.subr.mxu0 0.0
        %911 = vmatpush1.msra.mxu0 0.0
        %912 = vmatprep.subr.mxu0 0.0
        %913 = vmatpush1.msra.mxu0 0.0
        %914 = vmatprep.subr.mxu0 0.0
        %915 = vmatpush1.msra.mxu0 0.0
        %916 = vmatprep.subr.mxu0 0.0
        %917 = vmatpush1.msra.mxu0 0.0
        %918 = vmatprep.subr.mxu0 0.0
        %919 = vmatpush1.msra.mxu0 %v883
        %920 = vmatprep.subr.mxu0 0.0
        %921 = vmatpush2.msra.mxu0 0.0
        %922 = vmatprep.subr.mxu0 0.0
        %923 = vmatpush2.msra.mxu0 0.0
        %924 = vmatprep.subr.mxu0 0.0
        %925 = vmatpush2.msra.mxu0 0.0
        %926 = vmatprep.subr.mxu0 0.0
        %927 = vmatpush2.msra.mxu0 0.0
        %928 = vmatprep.subr.mxu0 0.0
        %929 = vmatpush2.msra.mxu0 0.0
        %930 = vmatprep.subr.mxu0 0.0
        %931 = vmatpush2.msra.mxu0 0.0
        %932 = vmatprep.subr.mxu0 0.0
        %933 = vmatpush2.msra.mxu0 0.0
        %934 = vmatprep.subr.mxu0 0.0
        %935 = vmatpush2.msra.mxu0 0.0
        %936 = vmatprep.subr.mxu0 0.0
        %937 = vmatpush2.msra.mxu0 0.0
        %938 = vmatprep.subr.mxu0 0.0
        %939 = vmatpush2.msra.mxu0 0.0
        %940 = vmatprep.subr.mxu0 0.0
        %941 = vmatpush2.msra.mxu0 0.0
        %942 = vmatprep.subr.mxu0 0.0
        %943 = vmatpush2.msra.mxu0 0.0
        %944 = vmatprep.subr.mxu0 0.0
        %945 = vmatpush2.msra.mxu0 0.0
        %946 = vmatprep.subr.mxu0 0.0
        %947 = vmatpush2.msra.mxu0 0.0
        %948 = vmatprep.subr.mxu0 0.0
        %949 = vmatpush2.msra.mxu0 0.0
        %950 = vmatprep.subr.mxu0 0.0
        %951 = vmatpush2.msra.mxu0 0.0
        %952 = vmatprep.mubr.f32.mxu0 0.0
        %953 = vmatmul.mubr.f32.gmra.mxu0 %v886
        %v954 = vpop.f32.mrf.mxu0
        %v955 = vadd.f32 0.0, %v954
        %v956 = vpop.f32.mrf.mxu0
        %957 = vdwg.mxu0
        %959 = vrot.lane.b32.xlu0 %v625, 8
        %v960 = vpop.permute.xlu0 %959
        %963 = vrot.lane.b32.xlu0 %v790, 16
        %v964 = vpop.permute.xlu0 %963
        %967 = vrot.lane.b32.xlu0 %v955, 24
        %v968 = vpop.permute.xlu0 %967
        %v970 = vsel %vm301, %v460, %v960
        %vm971 = vcmask 130048
        %v972 = vsel %vm971, %v970, %v964
        %vm973 = vcmask 195584
        %v974 = vsel %vm973, %v972, %v968
        %v975 = vld [vmem:[#allocation7 + $0x20] sm:$0xff]
        %v976 = vld [vmem:[#allocation7 + $0x28] sm:$0xff]
        %v977 = vld [vmem:[#allocation7 + $0x30] sm:$0xff]
        %v978 = vld [vmem:[#allocation7 + $0x38] sm:$0xff]
        %v979 = vld [vmem:[#allocation7 + $0xa1] sm:$0x1]
        %v980 = vlaneseq
        %v981 = vshrl.u32 %v980, 7
        %v982 = vsub.s32 0, %v981
        %v983 = vrot.slane %v979, %v982
        %v985 = vsel %vm224, %v974, 0
        %987 = vmatprep.subr.mxu0 0.0
        %988 = vmatpush1.msra.mxu0 0.0
        %989 = vmatprep.subr.mxu0 0.0
        %990 = vmatpush1.msra.mxu0 0.0
        %991 = vmatprep.subr.mxu0 0.0
        %992 = vmatpush1.msra.mxu0 0.0
        %993 = vmatprep.subr.mxu0 0.0
        %994 = vmatpush1.msra.mxu0 0.0
        %995 = vmatprep.subr.mxu0 0.0
        %996 = vmatpush1.msra.mxu0 0.0
        %997 = vmatprep.subr.mxu0 0.0
        %998 = vmatpush1.msra.mxu0 0.0
        %999 = vmatprep.subr.mxu0 0.0
        %1000 = vmatpush1.msra.mxu0 0.0
        %1001 = vmatprep.subr.mxu0 0.0
        %1002 = vmatpush1.msra.mxu0 0.0
        %1003 = vmatprep.subr.mxu0 0.0
        %1004 = vmatpush1.msra.mxu0 0.0
        %1005 = vmatprep.subr.mxu0 0.0
        %1006 = vmatpush1.msra.mxu0 0.0
        %1007 = vmatprep.subr.mxu0 0.0
        %1008 = vmatpush1.msra.mxu0 0.0
        %1009 = vmatprep.subr.mxu0 0.0
        %1010 = vmatpush1.msra.mxu0 0.0
        %1011 = vmatprep.subr.mxu0 0.0
        %1012 = vmatpush1.msra.mxu0 %v978
        %1013 = vmatprep.subr.mxu0 0.0
        %1014 = vmatpush1.msra.mxu0 %v977
        %1015 = vmatprep.subr.mxu0 0.0
        %1016 = vmatpush1.msra.mxu0 %v976
        %1017 = vmatprep.subr.mxu0 0.0
        %1018 = vmatpush1.msra.mxu0 %v975
        %1019 = vmatprep.subr.mxu0 0.0
        %1020 = vmatpush2.msra.mxu0 0.0
        %1021 = vmatprep.subr.mxu0 0.0
        %1022 = vmatpush2.msra.mxu0 0.0
        %1023 = vmatprep.subr.mxu0 0.0
        %1024 = vmatpush2.msra.mxu0 0.0
        %1025 = vmatprep.subr.mxu0 0.0
        %1026 = vmatpush2.msra.mxu0 0.0
        %1027 = vmatprep.subr.mxu0 0.0
        %1028 = vmatpush2.msra.mxu0 0.0
        %1029 = vmatprep.subr.mxu0 0.0
        %1030 = vmatpush2.msra.mxu0 0.0
        %1031 = vmatprep.subr.mxu0 0.0
        %1032 = vmatpush2.msra.mxu0 0.0
        %1033 = vmatprep.subr.mxu0 0.0
        %1034 = vmatpush2.msra.mxu0 0.0
        %1035 = vmatprep.subr.mxu0 0.0
        %1036 = vmatpush2.msra.mxu0 0.0
        %1037 = vmatprep.subr.mxu0 0.0
        %1038 = vmatpush2.msra.mxu0 0.0
        %1039 = vmatprep.subr.mxu0 0.0
        %1040 = vmatpush2.msra.mxu0 0.0
        %1041 = vmatprep.subr.mxu0 0.0
        %1042 = vmatpush2.msra.mxu0 0.0
        %1043 = vmatprep.subr.mxu0 0.0
        %1044 = vmatpush2.msra.mxu0 0.0
        %1045 = vmatprep.subr.mxu0 0.0
        %1046 = vmatpush2.msra.mxu0 0.0
        %1047 = vmatprep.subr.mxu0 0.0
        %1048 = vmatpush2.msra.mxu0 0.0
        %1049 = vmatprep.subr.mxu0 0.0
        %1050 = vmatpush2.msra.mxu0 0.0
        %1051 = vmatprep.mubr.f32.mxu0 0.0
        %1052 = vmatmul.mubr.f32.gmra.mxu0 %v985
        %v1053 = vpop.f32.mrf.mxu0
        %v1054 = vadd.f32 %v983, %v1053
        %v1055 = vpop.f32.mrf.mxu0
        %1056 = vdwg.mxu0
        %v1057 = vadd.f32 %v213, %v1054
        %v1058 = vld [vmem:[#allocation7 + $0xa4] sm:$0x1]
        %v1059 = vld [vmem:[#allocation7 + $0xa5] sm:$0x1]
        %v1060 = vsel %vm224, %v1057, 0.0
        %1061 = vadd.xlane.f32.xlu0 %v1060
        %v1062 = vpop.xlane.xlu0 %1061
        %v1063 = vrcp.pop 32.0
        %v1064 = vmul.f32 %v1062, %v1063
        %v1065 = vsub.f32 %v1057, %v1064
        %v1066 = vmul.f32 %v1065, %v1065
        %v1067 = vsel %vm224, %v1066, 0.0
        %1068 = vadd.xlane.f32.xlu0 %v1067
        %v1069 = vpop.xlane.xlu0 %1068
        %v1070 = vmul.f32 %v1069, %v1063
        %v1071 = vadd.f32 %v1070, 1e-05
        %v1072 = vrsqrt.pop %v1071
        %v1073 = vmul.f32 %v1065, %v1072
        %v1074 = vlaneseq
        %v1075 = vshrl.u32 %v1074, 7
        %v1076 = vsub.s32 0, %v1075
        %v1077 = vrot.slane %v1058, %v1076
        %v1078 = vmul.f32 %v1073, %v1077
        %v1079 = vlaneseq
        %v1080 = vshrl.u32 %v1079, 7
        %v1081 = vsub.s32 0, %v1080
        %v1082 = vrot.slane %v1059, %v1081
        %v1083 = vadd.f32 %v1078, %v1082
        %v1084 = vld [vmem:[#allocation7 + $0x40] sm:$0xff]
        %v1085 = vld [vmem:[#allocation7 + $0x48] sm:$0xff]
        %v1086 = vld [vmem:[#allocation7 + $0x50] sm:$0xff]
        %v1087 = vld [vmem:[#allocation7 + $0x58] sm:$0xff]
        %v1088 = vld [vmem:[#allocation7 + $0xa2] sm:$0x1]
        %v1089 = vlaneseq
        %v1090 = vshrl.u32 %v1089, 7
        %v1091 = vsub.s32 0, %v1090
        %v1092 = vrot.slane %v1088, %v1091
        %v1094 = vsel %vm224, %v1083, 0
        %1096 = vmatprep.subr.mxu0 0.0
        %1097 = vmatpush1.msra.mxu0 0.0
        %1098 = vmatprep.subr.mxu0 0.0
        %1099 = vmatpush1.msra.mxu0 0.0
        %1100 = vmatprep.subr.mxu0 0.0
        %1101 = vmatpush1.msra.mxu0 0.0
        %1102 = vmatprep.subr.mxu0 0.0
        %1103 = vmatpush1.msra.mxu0 0.0
        %1104 = vmatprep.subr.mxu0 0.0
        %1105 = vmatpush1.msra.mxu0 0.0
        %1106 = vmatprep.subr.mxu0 0.0
        %1107 = vmatpush1.msra.mxu0 0.0
        %1108 = vmatprep.subr.mxu0 0.0
        %1109 = vmatpush1.msra.mxu0 0.0
        %1110 = vmatprep.subr.mxu0 0.0
        %1111 = vmatpush1.msra.mxu0 0.0
        %1112 = vmatprep.subr.mxu0 0.0
        %1113 = vmatpush1.msra.mxu0 0.0
        %1114 = vmatprep.subr.mxu0 0.0
        %1115 = vmatpush1.msra.mxu0 0.0
        %1116 = vmatprep.subr.mxu0 0.0
        %1117 = vmatpush1.msra.mxu0 0.0
        %1118 = vmatprep.subr.mxu0 0.0
        %1119 = vmatpush1.msra.mxu0 0.0
        %1120 = vmatprep.subr.mxu0 0.0
        %1121 = vmatpush1.msra.mxu0 %v1087
        %1122 = vmatprep.subr.mxu0 0.0
        %1123 = vmatpush1.msra.mxu0 %v1086
        %1124 = vmatprep.subr.mxu0 0.0
        %1125 = vmatpush1.msra.mxu0 %v1085
        %1126 = vmatprep.subr.mxu0 0.0
        %1127 = vmatpush1.msra.mxu0 %v1084
        %1128 = vmatprep.subr.mxu0 0.0
        %1129 = vmatpush2.msra.mxu0 0.0
        %1130 = vmatprep.subr.mxu0 0.0
        %1131 = vmatpush2.msra.mxu0 0.0
        %1132 = vmatprep.subr.mxu0 0.0
        %1133 = vmatpush2.msra.mxu0 0.0
        %1134 = vmatprep.subr.mxu0 0.0
        %1135 = vmatpush2.msra.mxu0 0.0
        %1136 = vmatprep.subr.mxu0 0.0
        %1137 = vmatpush2.msra.mxu0 0.0
        %1138 = vmatprep.subr.mxu0 0.0
        %1139 = vmatpush2.msra.mxu0 0.0
        %1140 = vmatprep.subr.mxu0 0.0
        %1141 = vmatpush2.msra.mxu0 0.0
        %1142 = vmatprep.subr.mxu0 0.0
        %1143 = vmatpush2.msra.mxu0 0.0
        %1144 = vmatprep.subr.mxu0 0.0
        %1145 = vmatpush2.msra.mxu0 0.0
        %1146 = vmatprep.subr.mxu0 0.0
        %1147 = vmatpush2.msra.mxu0 0.0
        %1148 = vmatprep.subr.mxu0 0.0
        %1149 = vmatpush2.msra.mxu0 0.0
        %1150 = vmatprep.subr.mxu0 0.0
        %1151 = vmatpush2.msra.mxu0 0.0
        %1152 = vmatprep.subr.mxu0 0.0
        %1153 = vmatpush2.msra.mxu0 0.0
        %1154 = vmatprep.subr.mxu0 0.0
        %1155 = vmatpush2.msra.mxu0 0.0
        %1156 = vmatprep.subr.mxu0 0.0
        %1157 = vmatpush2.msra.mxu0 0.0
        %1158 = vmatprep.subr.mxu0 0.0
        %1159 = vmatpush2.msra.mxu0 0.0
        %1160 = vmatprep.mubr.f32.mxu0 0.0
        %1161 = vmatmul.mubr.f32.gmra.mxu0 %v1094
        %v1162 = vpop.f32.mrf.mxu0
        %v1163 = vadd.f32 %v1092, %v1162
        %v1164 = vpop.f32.mrf.mxu0
        %1165 = vdwg.mxu0
        %v1166 = vmax.f32 %v1163, 0.0
        %v1167 = vld [vmem:[#allocation7 + $0x60] sm:$0xff]
        %v1168 = vld [vmem:[#allocation7 + $0x68] sm:$0xff]
        %v1169 = vld [vmem:[#allocation7 + $0x70] sm:$0xff]
        %v1170 = vld [vmem:[#allocation7 + $0x78] sm:$0xff]
        %v1171 = vld [vmem:[#allocation7 + $0x80] sm:$0xff]
        %v1172 = vld [vmem:[#allocation7 + $0x88] sm:$0xff]
        %v1173 = vld [vmem:[#allocation7 + $0x90] sm:$0xff]
        %v1174 = vld [vmem:[#allocation7 + $0x98] sm:$0xff]
        %v1175 = vld [vmem:[#allocation7 + $0xa3] sm:$0x1]
        %v1176 = vlaneseq
        %v1177 = vshrl.u32 %v1176, 7
        %v1178 = vsub.s32 0, %v1177
        %v1179 = vrot.slane %v1175, %v1178
        %vm1180 = vcmask 523264
        %v1182 = vsel %vm1180, %v1166, 0
        %1184 = vmatprep.subr.mxu0 0.0
        %1185 = vmatpush1.msra.mxu0 0.0
        %1186 = vmatprep.subr.mxu0 0.0
        %1187 = vmatpush1.msra.mxu0 0.0
        %1188 = vmatprep.subr.mxu0 0.0
        %1189 = vmatpush1.msra.mxu0 0.0
        %1190 = vmatprep.subr.mxu0 0.0
        %1191 = vmatpush1.msra.mxu0 0.0
        %1192 = vmatprep.subr.mxu0 0.0
        %1193 = vmatpush1.msra.mxu0 0.0
        %1194 = vmatprep.subr.mxu0 0.0
        %1195 = vmatpush1.msra.mxu0 0.0
        %1196 = vmatprep.subr.mxu0 0.0
        %1197 = vmatpush1.msra.mxu0 0.0
        %1198 = vmatprep.subr.mxu0 0.0
        %1199 = vmatpush1.msra.mxu0 0.0
        %1200 = vmatprep.subr.mxu0 0.0
        %1201 = vmatpush1.msra.mxu0 %v1174
        %1202 = vmatprep.subr.mxu0 0.0
        %1203 = vmatpush1.msra.mxu0 %v1173
        %1204 = vmatprep.subr.mxu0 0.0
        %1205 = vmatpush1.msra.mxu0 %v1172
        %1206 = vmatprep.subr.mxu0 0.0
        %1207 = vmatpush1.msra.mxu0 %v1171
        %1208 = vmatprep.subr.mxu0 0.0
        %1209 = vmatpush1.msra.mxu0 %v1170
        %1210 = vmatprep.subr.mxu0 0.0
        %1211 = vmatpush1.msra.mxu0 %v1169
        %1212 = vmatprep.subr.mxu0 0.0
        %1213 = vmatpush1.msra.mxu0 %v1168
        %1214 = vmatprep.subr.mxu0 0.0
        %1215 = vmatpush1.msra.mxu0 %v1167
        %1216 = vmatprep.subr.mxu0 0.0
        %1217 = vmatpush2.msra.mxu0 0.0
        %1218 = vmatprep.subr.mxu0 0.0
        %1219 = vmatpush2.msra.mxu0 0.0
        %1220 = vmatprep.subr.mxu0 0.0
        %1221 = vmatpush2.msra.mxu0 0.0
        %1222 = vmatprep.subr.mxu0 0.0
        %1223 = vmatpush2.msra.mxu0 0.0
        %1224 = vmatprep.subr.mxu0 0.0
        %1225 = vmatpush2.msra.mxu0 0.0
        %1226 = vmatprep.subr.mxu0 0.0
        %1227 = vmatpush2.msra.mxu0 0.0
        %1228 = vmatprep.subr.mxu0 0.0
        %1229 = vmatpush2.msra.mxu0 0.0
        %1230 = vmatprep.subr.mxu0 0.0
        %1231 = vmatpush2.msra.mxu0 0.0
        %1232 = vmatprep.subr.mxu0 0.0
        %1233 = vmatpush2.msra.mxu0 0.0
        %1234 = vmatprep.subr.mxu0 0.0
        %1235 = vmatpush2.msra.mxu0 0.0
        %1236 = vmatprep.subr.mxu0 0.0
        %1237 = vmatpush2.msra.mxu0 0.0
        %1238 = vmatprep.subr.mxu0 0.0
        %1239 = vmatpush2.msra.mxu0 0.0
        %1240 = vmatprep.subr.mxu0 0.0
        %1241 = vmatpush2.msra.mxu0 0.0
        %1242 = vmatprep.subr.mxu0 0.0
        %1243 = vmatpush2.msra.mxu0 0.0
        %1244 = vmatprep.subr.mxu0 0.0
        %1245 = vmatpush2.msra.mxu0 0.0
        %1246 = vmatprep.subr.mxu0 0.0
        %1247 = vmatpush2.msra.mxu0 0.0
        %1248 = vmatprep.mubr.f32.mxu0 0.0
        %1249 = vmatmul.mubr.f32.gmra.mxu0 %v1182
        %v1250 = vpop.f32.mrf.mxu0
        %v1251 = vadd.f32 %v1179, %v1250
        %v1252 = vpop.f32.mrf.mxu0
        %1253 = vdwg.mxu0
        %v1254 = vadd.f32 %v1083, %v1251
        %v1255 = vld [vmem:[#allocation7 + $0xa6] sm:$0x1]
        %v1256 = vld [vmem:[#allocation7 + $0xa7] sm:$0x1]
        %v1257 = vsel %vm224, %v1254, 0.0
        %1258 = vadd.xlane.f32.xlu0 %v1257
        %v1259 = vpop.xlane.xlu0 %1258
        %v1260 = vmul.f32 %v1259, %v1063
        %v1261 = vsub.f32 %v1254, %v1260
        %v1262 = vmul.f32 %v1261, %v1261
        %v1263 = vsel %vm224, %v1262, 0.0
        %1264 = vadd.xlane.f32.xlu0 %v1263
        %v1265 = vpop.xlane.xlu0 %1264
        %v1266 = vmul.f32 %v1265, %v1063
        %v1267 = vadd.f32 %v1266, 1e-05
        %v1268 = vrsqrt.pop %v1267
        %v1269 = vmul.f32 %v1261, %v1268
        %v1270 = vlaneseq
        %v1271 = vshrl.u32 %v1270, 7
        %v1272 = vsub.s32 0, %v1271
        %v1273 = vrot.slane %v1255, %v1272
        %v1274 = vmul.f32 %v1269, %v1273
        %v1275 = vlaneseq
        %v1276 = vshrl.u32 %v1275, 7
        %v1277 = vsub.s32 0, %v1276
        %v1278 = vrot.slane %v1256, %v1277
        %v1279 = vadd.f32 %v1274, %v1278
        %1280 = vst.msk [vmem:[%s212] sm:$0xff] %vm224, %v1279
        %s1281 = sand.u32 %s97, 1
        %s1282 = scalar_lea.sflag [#allocation4], %s1281
        %s1283 = sand.u32 %s97, 1
        %s1284 = smul.addr %s1283, 8
        %s1285 = scalar_lea.vmem [#allocation8], %s1284
        // Predicated region
        $region45: #{tpu_custom_call.1} parent=31 // pred_check
          %p1286 = pneg %p107
        $region46: #{tpu_custom_call.1} parent=31 // pred_check_branch
          %1288 = sbr.rel (%p1286) target = $region48
        $region47: #{tpu_custom_call.1} parent=31 // pred_region
          %s1290 = ssub.s32 128, 128
          %1291 = vsyncadd %s1282, %s1290
          %s1292 = smul.addr %s21, 128
          %s1293 = scalar_lea.hbm %s3, %s1292
          %s1295 = sshll.u32 %s1285, 4
          %s1296 = int_to_ptr.vmem [resolvable:$true] %s1295
          %1298 = dma.vmem_to_hbm [thread:$0]  %s1296, 128, %s1293, %s1282
        $region48: #{tpu_custom_call.1} parent=31 // pred_fallthru
          _
      $region32: #{tpu_custom_call.1} parent=5 // pred_fallthru
        _
      %p1299 = scmp.le.s32.totalorder 2, %s16
      // Predicated region
      $region49: #{tpu_custom_call.1} parent=5 // pred_check
        %p1300 = pneg %p1299
      $region50: #{tpu_custom_call.1} parent=5 // pred_check_branch
        %1302 = sbr.rel (%p1300) target = $region52
      $region51: #{tpu_custom_call.1} parent=5 // pred_region
        %s1303 = ssub.s32 %s16, 2
        // Predicated region
        $region53: #{tpu_custom_call.1} parent=51 // pred_check
          %p1304 = pneg %p113
        $region54: #{tpu_custom_call.1} parent=51 // pred_check_branch
          %1306 = sbr.rel (%p1304) target = $region56
        $region55: #{tpu_custom_call.1} parent=51 // pred_region
          %s1307 = sand.u32 %s98, 1
          %s1308 = scalar_lea.sflag [#allocation4], %s1307
          %s1309 = sand.u32 %s98, 1
          %s1310 = smul.addr %s1309, 8
          %s1311 = scalar_lea.vmem [#allocation8], %s1310
          %1312 = dma.done %s1308, 128
        $region56: #{tpu_custom_call.1} parent=51 // pred_fallthru
          _
      $region52: #{tpu_custom_call.1} parent=5 // pred_fallthru
        _
    $region6: #{tpu_custom_call.1} parent=1 // loop_footer
      %s20 = sadd.s32 1, %s16
    $region7: #{tpu_custom_call.1} parent=1 // loop_footer_branch
      %15 = sbr.rel target = $region3
    $region8: #{tpu_custom_call.1} parent=1 // loop_exit
      _
    %1313 = vsyncpa [#allocation3], 1
    %s1314 = scalar_lea.sflag [#allocation3], 1
    %1315 = vsyncpa %s1314, 1
    %1316 = vsyncpa [#allocation6], 1
    %1317 = vsyncpa [#allocation4], 1
    %s1318 = scalar_lea.sflag [#allocation4], 1
    %1319 = vsyncpa %s1318, 1

</llo_original>
